<compile_context>
chip_gen: v6e
topology: v6e:2x2x1
jax: 0.10.0
libtpu: 0.0.40
codegen_flags: <defaults>
</compile_context>

<pallas_src>
import functools

import jax
import jax.numpy as jnp
from jax.experimental import pallas as pl
from jax.experimental.pallas import tpu as pltpu

EPS = 1e-5


def _conv_stats_kernel(x_ref, w_ref, y_ref, sum_ref, ssq_ref, *, KH, TOH, OW, stride, CKW):
    # x_ref  : (Hp, OW, KW*C)  bf16  W-lowered, spatially padded slab for this image
    # w_ref  : (KH, KW*C, OCp) bf16  conv weight (output channels zero-padded to OCp)
    # y_ref  : (TM, OCp)       f32   un-normalized conv output tile (also the accumulator)
    # sum_ref/ssq_ref : (1, OCp) f32 per-(image, tile) partial batch statistics
    t = pl.program_id(1)
    TM = TOH * OW
    for kh in range(KH):
        if stride == 1:
            xs = x_ref[pl.ds(t * TOH + kh, TOH), :, :]
        else:
            # TODO(synk): for stride > 1 a host-side space-to-depth of the H axis would
            # keep this on the plain contiguous-load path.
            xs = x_ref[pl.ds(t * TOH * stride + kh, TOH, stride), :, :]
        contrib = jnp.dot(xs.reshape(TM, CKW), w_ref[kh],
                          preferred_element_type=jnp.float32)
        if kh == 0:
            y_ref[...] = contrib
        else:
            y_ref[...] += contrib          # accumulate in the VMEM output block (no spills)
    y = y_ref[...]
    sum_ref[...] = jnp.sum(y, axis=0, keepdims=True)
    ssq_ref[...] = jnp.sum(y * y, axis=0, keepdims=True)


def _scale_shift_kernel(y_ref, scale_ref, shift_ref, o_ref):
    # Pure lane-dense per-channel affine: y * scale + shift.
    o_ref[...] = y_ref[...] * scale_ref[...] + shift_ref[...]


def conv_bn(x, weight, gamma, beta, *, stride=1, padding=0):
    """x: (N, C, H, W) f32; weight: (OC, IC, KH, KW); gamma/beta: (OC,). Returns NCHW f32."""
    N, C, H, W = x.shape
    OC, IC, KH, KW = weight.shape
    assert IC == C
    OH = (H + 2 * padding - KH) // stride + 1
    OW = (W + 2 * padding - KW) // stride + 1
    assert OH > 0 and OW > 0

    # ---- glue: NHWC, spatial zero-pad, W-lowering (KW folded into channels), bf16 ----
    x_nhwc = jnp.transpose(x, (0, 2, 3, 1))
    xp = jnp.pad(x_nhwc, ((0, 0), (padding, padding), (padding, padding), (0, 0)))
    Hp = H + 2 * padding
    cols = [xp[:, :, kw:kw + (OW - 1) * stride + 1:stride, :] for kw in range(KW)]
    x_wf = jnp.concatenate(cols, axis=-1).astype(jnp.bfloat16)   # (N, Hp, OW, KW*C)
    CKW = KW * C

    # Lane-dense padded output channels: 128-aligned, 256-aligned for mid/large OC
    # so the matmul N dim fills the 2x256x256 MXU on v6e/v7x.
    if OC >= 192:
        OCp = ((OC + 255) // 256) * 256
    else:
        OCp = ((OC + 127) // 128) * 128

    # Weight -> (KH, KW*C, OCp), matching the x_wf patch layout. Padded output channels
    # are all-zero so their conv output / stats are 0; they are cropped in the wrapper.
    w_r = jnp.transpose(weight, (2, 3, 1, 0)).reshape(KH, CKW, OC)
    w_r = jnp.pad(w_r, ((0, 0), (0, 0), (0, OCp - OC))).astype(jnp.bfloat16)

    g_p = jnp.pad(gamma.astype(jnp.float32), (0, OCp - OC)).reshape(1, OCp)
    b_p = jnp.pad(beta.astype(jnp.float32), (0, OCp - OC)).reshape(1, OCp)

    # ---- output-row tiling: TM <= 512, multiple of 8 (prefer multiple of 256) ----
    MAX_TILE_ROWS = 512
    divs = [d for d in range(1, OH + 1) if OH % d == 0]
    cands = [d for d in divs if d * OW <= MAX_TILE_ROWS and (d * OW) % 8 == 0]
    if cands:
        pref = [d for d in cands if (d * OW) % 256 == 0]
        TOH = max(pref) if pref else max(cands)
    else:
        # Hardened fallback: smallest sublane-friendly divisor (may exceed MAX_TILE_ROWS),
        # else the full extent (block == full array dim, which is always legal).
        big = [d for d in divs if (d * OW) % 8 == 0]
        TOH = min(big) if big else OH
    n_t = OH // TOH
    TM = TOH * OW
    M = N * OH * OW

    # ---- VMEM budget for the per-step working set (binding on v5e's 16 MiB default) ----
    x_slab_bytes = Hp * OW * CKW * 2
    w_bytes = KH * CKW * OCp * 2
    y_blk_bytes = TM * OCp * 4
    stat_bytes = 2 * OCp * 4
    vmem_need = 2 * (x_slab_bytes + w_bytes + y_blk_bytes + 2 * stat_bytes)
    vmem_limit = int(min(64 * 1024 * 1024, max(16 * 1024 * 1024, 2 * vmem_need)))

    conv_kernel = functools.partial(
        _conv_stats_kernel, KH=KH, TOH=TOH, OW=OW, stride=stride, CKW=CKW)

    cost_a = pl.CostEstimate(
        flops=2 * M * (KH * CKW) * OCp,
        transcendentals=0,
        bytes_accessed=x_wf.size * 2 + w_r.size * 2 + M * OCp * 4 + 2 * N * n_t * OCp * 4,
    )

    # ---- Call A: conv + partial batch statistics ----
    y_unnorm, part_sum, part_ssq = pl.pallas_call(
        conv_kernel,
        out_shape=(
            jax.ShapeDtypeStruct((N, OH * OW, OCp), jnp.float32),
            jax.ShapeDtypeStruct((N, n_t, 1, OCp), jnp.float32),
            jax.ShapeDtypeStruct((N, n_t, 1, OCp), jnp.float32),
        ),
        grid=(N, n_t),
        in_specs=[
            # Per-image W-lowered slab; block index constant across oh tiles so it stays
            # VMEM-resident for every tile of this image.
            pl.BlockSpec((None, Hp, OW, CKW), lambda n, t: (n, 0, 0, 0)),
            pl.BlockSpec((KH, CKW, OCp), lambda n, t: (0, 0, 0)),
        ],
        out_specs=(
            pl.BlockSpec((None, TM, OCp), lambda n, t: (n, t, 0)),
            pl.BlockSpec((None, None, 1, OCp), lambda n, t: (n, t, 0, 0)),
            pl.BlockSpec((None, None, 1, OCp), lambda n, t: (n, t, 0, 0)),
        ),
        compiler_params=pltpu.CompilerParams(
            dimension_semantics=("parallel", "parallel"),
            vmem_limit_bytes=vmem_limit),
        cost_estimate=cost_a,
    )(x_wf, w_r)

    # ---- tiny JAX reduction: fold batch stats into per-channel scale/shift ----
    inv_m = 1.0 / float(M)
    sum_c = jnp.sum(part_sum, axis=(0, 1))                       # (1, OCp)
    ssq_c = jnp.sum(part_ssq, axis=(0, 1))                       # (1, OCp)
    mean = sum_c * inv_m
    var = jnp.maximum(ssq_c * inv_m - mean * mean, 0.0)          # guard tiny cancellation
    scale = g_p * jax.lax.rsqrt(var + EPS)                       # folded BN: y*scale + shift
    shift = b_p - mean * scale

    cost_b = pl.CostEstimate(
        flops=2 * M * OCp,
        transcendentals=0,
        bytes_accessed=2 * M * OCp * 4 + 2 * OCp * 4,
    )

    # ---- Call B: lane-dense scale/shift, in place on the call-A output buffer ----
    out = pl.pallas_call(
        _scale_shift_kernel,
        out_shape=jax.ShapeDtypeStruct((N, OH * OW, OCp), jnp.float32),
        grid=(N, n_t),
        in_specs=[
            pl.BlockSpec((None, TM, OCp), lambda n, t: (n, t, 0)),
            pl.BlockSpec((1, OCp), lambda n, t: (0, 0)),
            pl.BlockSpec((1, OCp), lambda n, t: (0, 0)),
        ],
        out_specs=pl.BlockSpec((None, TM, OCp), lambda n, t: (n, t, 0)),
        input_output_aliases={0: 0},
        compiler_params=pltpu.CompilerParams(
            dimension_semantics=("parallel", "parallel"),
            vmem_limit_bytes=vmem_limit),
        cost_estimate=cost_b,
    )(y_unnorm, scale, shift)

    # Crop the padded channels and return NCHW (crop folds into the transpose).
    y = out[:, :, :OC].reshape(N, OH, OW, OC)
    return jnp.transpose(y, (0, 3, 1, 2))


def _reference(x, weight, gamma, beta, *, stride=1, padding=0):
    y = jax.lax.conv_general_dilated(
        x, weight,
        window_strides=(stride, stride),
        padding=((padding, padding), (padding, padding)),
        dimension_numbers=("NCHW", "OIHW", "NCHW"),
    )
    mean = jnp.mean(y, axis=(0, 2, 3), keepdims=True)
    var = jnp.var(y, axis=(0, 2, 3), keepdims=True)  # biased, like BN normalization
    return (y - mean) / jnp.sqrt(var + EPS) * gamma.reshape(1, -1, 1, 1) + beta.reshape(1, -1, 1, 1)


if __name__ == "__main__":
    # ConvBn(in_planes=4, out_planes=8, kernel_size=3, stride=1, padding=1)
    N, C, H, W = 2, 4, 16, 16
    OC, KH, KW = 8, 3, 3
    stride, padding = 1, 1

    key = jax.random.PRNGKey(0)
    kx, kw_, kg, kb = jax.random.split(key, 4)
    x = jax.random.normal(kx, (N, C, H, W), dtype=jnp.float32)
    weight = jax.random.normal(kw_, (OC, C, KH, KW), dtype=jnp.float32) * 0.1
    gamma = 1.0 + 0.1 * jax.random.normal(kg, (OC,), dtype=jnp.float32)
    beta = 0.1 * jax.random.normal(kb, (OC,), dtype=jnp.float32)

    fn = jax.jit(functools.partial(conv_bn, stride=stride, padding=padding))
    out = jax.block_until_ready(fn(x, weight, gamma, beta))

    ref = _reference(x, weight, gamma, beta, stride=stride, padding=padding)
    assert out.shape == (N, OC, H, W), out.shape
    max_err = float(jnp.max(jnp.abs(out - ref)))
    # bf16 matmul inputs (f32 accumulation / BN stats) -> slightly looser tolerance.
    assert jnp.allclose(out, ref, atol=2e-2, rtol=2e-2), max_err

    print("KERNEL_OK")
</pallas_src>

<mosaic_0001>
module attributes {stable_mosaic.version = 11 : i64} {
  func.func @_conv_stats_kernel(%arg0: i32, %arg1: i32, %arg2: memref<1x18x16x12xbf16, #tpu.memory_space<vmem>>, %arg3: memref<3x12x128xbf16, #tpu.memory_space<vmem>>, %arg4: memref<1x256x128xf32, #tpu.memory_space<vmem>>, %arg5: memref<1x1x1x128xf32, #tpu.memory_space<vmem>>, %arg6: memref<1x1x1x128xf32, #tpu.memory_space<vmem>>) attributes {dimension_semantics = [#tpu.dimension_semantics<parallel>, #tpu.dimension_semantics<parallel>], iteration_bounds = array<i64: 2, 1>, scalar_prefetch = 0 : i64, scratch_operands = 0 : i64, tpu.core_type = #tpu.core_type<tc>, window_params = [{transform_indices = @transform_0, window_bounds = array<i64: 1, 18, 16, 12>}, {pipeline_mode = #tpu.pipeline_mode<synchronous>, transform_indices = @transform_1, window_bounds = array<i64: 3, 12, 128>}, {transform_indices = @transform_2, window_bounds = array<i64: 1, 256, 128>}, {transform_indices = @transform_3, window_bounds = array<i64: 1, 1, 1, 128>}, {transform_indices = @transform_4, window_bounds = array<i64: 1, 1, 1, 128>}]} {
    %c16_i32 = arith.constant 16 : i32
    %0 = arith.muli %arg1, %c16_i32 : i32
    %c0_i32 = arith.constant 0 : i32
    %1 = arith.addi %0, %c0_i32 : i32
    %c0 = arith.constant 0 : index
    %2 = arith.index_cast %1 : i32 to index
    %c0_0 = arith.constant 0 : index
    %c0_1 = arith.constant 0 : index
    %3 = vector.load %arg2[%c0, %2, %c0_0, %c0_1] : memref<1x18x16x12xbf16, #tpu.memory_space<vmem>>, vector<1x16x16x12xbf16>
    %4 = vector.shape_cast %3 : vector<1x16x16x12xbf16> to vector<16x16x12xbf16>
    %5 = vector.shape_cast %4 : vector<16x16x12xbf16> to vector<256x12xbf16>
    %c0_2 = arith.constant 0 : index
    %c0_3 = arith.constant 0 : index
    %c0_4 = arith.constant 0 : index
    %6 = vector.load %arg3[%c0_2, %c0_3, %c0_4] : memref<3x12x128xbf16, #tpu.memory_space<vmem>>, vector<1x12x128xbf16>
    %7 = vector.shape_cast %6 : vector<1x12x128xbf16> to vector<12x128xbf16>
    %cst = arith.constant dense<0.000000e+00> : vector<256x128xf32>
    %8 = tpu.matmul %5, %7, %cst {dimension_numbers = #tpu.dot_dimension_numbers<[1], [0], [0], [1], [0, 0, 1, 1], [], []>} : vector<256x12xbf16>, vector<12x128xbf16>, vector<256x128xf32> -> vector<256x128xf32>
    %c0_5 = arith.constant 0 : index
    %c0_6 = arith.constant 0 : index
    %c0_7 = arith.constant 0 : index
    %9 = vector.load %arg4[%c0_5, %c0_6, %c0_7] : memref<1x256x128xf32, #tpu.memory_space<vmem>>, vector<1x256x128xf32>
    %10 = vector.shape_cast %9 : vector<1x256x128xf32> to vector<256x128xf32>
    %11 = vector.shape_cast %8 : vector<256x128xf32> to vector<1x256x128xf32>
    tpu.vector_store %arg4[%c0_5, %c0_6, %c0_7], %11 {strides = array<i32>} : memref<1x256x128xf32, #tpu.memory_space<vmem>>, vector<1x256x128xf32>,
    %c16_i32_8 = arith.constant 16 : i32
    %12 = arith.muli %arg1, %c16_i32_8 : i32
    %c1_i32 = arith.constant 1 : i32
    %13 = arith.addi %12, %c1_i32 : i32
    %c0_9 = arith.constant 0 : index
    %14 = arith.index_cast %13 : i32 to index
    %c0_10 = arith.constant 0 : index
    %c0_11 = arith.constant 0 : index
    %15 = vector.load %arg2[%c0_9, %14, %c0_10, %c0_11] : memref<1x18x16x12xbf16, #tpu.memory_space<vmem>>, vector<1x16x16x12xbf16>
    %16 = vector.shape_cast %15 : vector<1x16x16x12xbf16> to vector<16x16x12xbf16>
    %17 = vector.shape_cast %16 : vector<16x16x12xbf16> to vector<256x12xbf16>
    %c1 = arith.constant 1 : index
    %c0_12 = arith.constant 0 : index
    %c0_13 = arith.constant 0 : index
    %18 = vector.load %arg3[%c1, %c0_12, %c0_13] : memref<3x12x128xbf16, #tpu.memory_space<vmem>>, vector<1x12x128xbf16>
    %19 = vector.shape_cast %18 : vector<1x12x128xbf16> to vector<12x128xbf16>
    %cst_14 = arith.constant dense<0.000000e+00> : vector<256x128xf32>
    %20 = tpu.matmul %17, %19, %cst_14 {dimension_numbers = #tpu.dot_dimension_numbers<[1], [0], [0], [1], [0, 0, 1, 1], [], []>} : vector<256x12xbf16>, vector<12x128xbf16>, vector<256x128xf32> -> vector<256x128xf32>
    %c0_15 = arith.constant 0 : index
    %c0_16 = arith.constant 0 : index
    %c0_17 = arith.constant 0 : index
    %21 = vector.load %arg4[%c0_15, %c0_16, %c0_17] : memref<1x256x128xf32, #tpu.memory_space<vmem>>, vector<1x256x128xf32>
    %22 = vector.shape_cast %21 : vector<1x256x128xf32> to vector<256x128xf32>
    %23 = arith.addf %22, %20 : vector<256x128xf32>
    %c0_18 = arith.constant 0 : index
    %c0_19 = arith.constant 0 : index
    %c0_20 = arith.constant 0 : index
    %24 = vector.load %arg4[%c0_18, %c0_19, %c0_20] : memref<1x256x128xf32, #tpu.memory_space<vmem>>, vector<1x256x128xf32>
    %25 = vector.shape_cast %24 : vector<1x256x128xf32> to vector<256x128xf32>
    %26 = vector.shape_cast %23 : vector<256x128xf32> to vector<1x256x128xf32>
    tpu.vector_store %arg4[%c0_18, %c0_19, %c0_20], %26 {strides = array<i32>} : memref<1x256x128xf32, #tpu.memory_space<vmem>>, vector<1x256x128xf32>,
    %c16_i32_21 = arith.constant 16 : i32
    %27 = arith.muli %arg1, %c16_i32_21 : i32
    %c2_i32 = arith.constant 2 : i32
    %28 = arith.addi %27, %c2_i32 : i32
    %c0_22 = arith.constant 0 : index
    %29 = arith.index_cast %28 : i32 to index
    %c0_23 = arith.constant 0 : index
    %c0_24 = arith.constant 0 : index
    %30 = vector.load %arg2[%c0_22, %29, %c0_23, %c0_24] : memref<1x18x16x12xbf16, #tpu.memory_space<vmem>>, vector<1x16x16x12xbf16>
    %31 = vector.shape_cast %30 : vector<1x16x16x12xbf16> to vector<16x16x12xbf16>
    %32 = vector.shape_cast %31 : vector<16x16x12xbf16> to vector<256x12xbf16>
    %c2 = arith.constant 2 : index
    %c0_25 = arith.constant 0 : index
    %c0_26 = arith.constant 0 : index
    %33 = vector.load %arg3[%c2, %c0_25, %c0_26] : memref<3x12x128xbf16, #tpu.memory_space<vmem>>, vector<1x12x128xbf16>
    %34 = vector.shape_cast %33 : vector<1x12x128xbf16> to vector<12x128xbf16>
    %cst_27 = arith.constant dense<0.000000e+00> : vector<256x128xf32>
    %35 = tpu.matmul %32, %34, %cst_27 {dimension_numbers = #tpu.dot_dimension_numbers<[1], [0], [0], [1], [0, 0, 1, 1], [], []>} : vector<256x12xbf16>, vector<12x128xbf16>, vector<256x128xf32> -> vector<256x128xf32>
    %c0_28 = arith.constant 0 : index
    %c0_29 = arith.constant 0 : index
    %c0_30 = arith.constant 0 : index
    %36 = vector.load %arg4[%c0_28, %c0_29, %c0_30] : memref<1x256x128xf32, #tpu.memory_space<vmem>>, vector<1x256x128xf32>
    %37 = vector.shape_cast %36 : vector<1x256x128xf32> to vector<256x128xf32>
    %38 = arith.addf %37, %35 : vector<256x128xf32>
    %c0_31 = arith.constant 0 : index
    %c0_32 = arith.constant 0 : index
    %c0_33 = arith.constant 0 : index
    %39 = vector.load %arg4[%c0_31, %c0_32, %c0_33] : memref<1x256x128xf32, #tpu.memory_space<vmem>>, vector<1x256x128xf32>
    %40 = vector.shape_cast %39 : vector<1x256x128xf32> to vector<256x128xf32>
    %41 = vector.shape_cast %38 : vector<256x128xf32> to vector<1x256x128xf32>
    tpu.vector_store %arg4[%c0_31, %c0_32, %c0_33], %41 {strides = array<i32>} : memref<1x256x128xf32, #tpu.memory_space<vmem>>, vector<1x256x128xf32>,
    %c0_34 = arith.constant 0 : index
    %c0_35 = arith.constant 0 : index
    %c0_36 = arith.constant 0 : index
    %42 = vector.load %arg4[%c0_34, %c0_35, %c0_36] : memref<1x256x128xf32, #tpu.memory_space<vmem>>, vector<1x256x128xf32>
    %43 = vector.shape_cast %42 : vector<1x256x128xf32> to vector<256x128xf32>
    %cst_37 = arith.constant dense<0.000000e+00> : vector<128xf32>
    %44 = vector.multi_reduction <add>, %43, %cst_37 [0] : vector<256x128xf32> to vector<128xf32>
    %45 = vector.shape_cast %44 : vector<128xf32> to vector<1x128xf32>
    %c0_38 = arith.constant 0 : index
    %c0_39 = arith.constant 0 : index
    %c0_40 = arith.constant 0 : index
    %c0_41 = arith.constant 0 : index
    %46 = vector.load %arg5[%c0_38, %c0_39, %c0_40, %c0_41] : memref<1x1x1x128xf32, #tpu.memory_space<vmem>>, vector<1x1x1x128xf32>
    %47 = vector.shape_cast %46 : vector<1x1x1x128xf32> to vector<1x128xf32>
    %48 = vector.shape_cast %45 : vector<1x128xf32> to vector<1x1x1x128xf32>
    tpu.vector_store %arg5[%c0_38, %c0_39, %c0_40, %c0_41], %48 {strides = array<i32>} : memref<1x1x1x128xf32, #tpu.memory_space<vmem>>, vector<1x1x1x128xf32>,
    %49 = arith.mulf %43, %43 : vector<256x128xf32>
    %cst_42 = arith.constant dense<0.000000e+00> : vector<128xf32>
    %50 = vector.multi_reduction <add>, %49, %cst_42 [0] : vector<256x128xf32> to vector<128xf32>
    %51 = vector.shape_cast %50 : vector<128xf32> to vector<1x128xf32>
    %c0_43 = arith.constant 0 : index
    %c0_44 = arith.constant 0 : index
    %c0_45 = arith.constant 0 : index
    %c0_46 = arith.constant 0 : index
    %52 = vector.load %arg6[%c0_43, %c0_44, %c0_45, %c0_46] : memref<1x1x1x128xf32, #tpu.memory_space<vmem>>, vector<1x1x1x128xf32>
    %53 = vector.shape_cast %52 : vector<1x1x1x128xf32> to vector<1x128xf32>
    %54 = vector.shape_cast %51 : vector<1x128xf32> to vector<1x1x1x128xf32>
    tpu.vector_store %arg6[%c0_43, %c0_44, %c0_45, %c0_46], %54 {strides = array<i32>} : memref<1x1x1x128xf32, #tpu.memory_space<vmem>>, vector<1x1x1x128xf32>,
    return
  }
  func.func @transform_0(%arg0: i32, %arg1: i32) -> (i32, i32, i32, i32) {
    %c0_i32 = arith.constant 0 : i32
    %c0_i32_0 = arith.constant 0 : i32
    %c0_i32_1 = arith.constant 0 : i32
    %c0_i32_2 = arith.constant 0 : i32
    return %arg0, %c0_i32, %c0_i32_0, %c0_i32_1 : i32, i32, i32, i32
  }
  func.func @transform_1(%arg0: i32, %arg1: i32) -> (i32, i32, i32) {
    %c0_i32 = arith.constant 0 : i32
    %c0_i32_0 = arith.constant 0 : i32
    %c0_i32_1 = arith.constant 0 : i32
    %c0_i32_2 = arith.constant 0 : i32
    return %c0_i32, %c0_i32_0, %c0_i32_1 : i32, i32, i32
  }
  func.func @transform_2(%arg0: i32, %arg1: i32) -> (i32, i32, i32) {
    %c0_i32 = arith.constant 0 : i32
    %c0_i32_0 = arith.constant 0 : i32
    return %arg0, %arg1, %c0_i32 : i32, i32, i32
  }
  func.func @transform_3(%arg0: i32, %arg1: i32) -> (i32, i32, i32, i32) {
    %c0_i32 = arith.constant 0 : i32
    %c0_i32_0 = arith.constant 0 : i32
    %c0_i32_1 = arith.constant 0 : i32
    return %arg0, %arg1, %c0_i32, %c0_i32_0 : i32, i32, i32, i32
  }
  func.func @transform_4(%arg0: i32, %arg1: i32) -> (i32, i32, i32, i32) {
    %c0_i32 = arith.constant 0 : i32
    %c0_i32_0 = arith.constant 0 : i32
    %c0_i32_1 = arith.constant 0 : i32
    return %arg0, %arg1, %c0_i32, %c0_i32_0 : i32, i32, i32, i32
  }
}

module attributes {stable_mosaic.version = 11 : i64} {
  func.func @_scale_shift_kernel(%arg0: i32, %arg1: i32, %arg2: memref<1x256x128xf32, #tpu.memory_space<vmem>>, %arg3: memref<1x128xf32, #tpu.memory_space<vmem>>, %arg4: memref<1x128xf32, #tpu.memory_space<vmem>>, %arg5: memref<1x256x128xf32, #tpu.memory_space<vmem>>) attributes {dimension_semantics = [#tpu.dimension_semantics<parallel>, #tpu.dimension_semantics<parallel>], iteration_bounds = array<i64: 2, 1>, scalar_prefetch = 0 : i64, scratch_operands = 0 : i64, tpu.core_type = #tpu.core_type<tc>, window_params = [{transform_indices = @transform_0, window_bounds = array<i64: 1, 256, 128>}, {pipeline_mode = #tpu.pipeline_mode<synchronous>, transform_indices = @transform_1, window_bounds = array<i64: 1, 128>}, {pipeline_mode = #tpu.pipeline_mode<synchronous>, transform_indices = @transform_2, window_bounds = array<i64: 1, 128>}, {transform_indices = @transform_3, window_bounds = array<i64: 1, 256, 128>}]} {
    %c0 = arith.constant 0 : index
    %c0_0 = arith.constant 0 : index
    %c0_1 = arith.constant 0 : index
    %0 = vector.load %arg2[%c0, %c0_0, %c0_1] : memref<1x256x128xf32, #tpu.memory_space<vmem>>, vector<1x256x128xf32>
    %1 = vector.shape_cast %0 : vector<1x256x128xf32> to vector<256x128xf32>
    %c0_2 = arith.constant 0 : index
    %c0_3 = arith.constant 0 : index
    %2 = vector.load %arg3[%c0_2, %c0_3] : memref<1x128xf32, #tpu.memory_space<vmem>>, vector<1x128xf32>
    %3 = vector.broadcast %2 : vector<1x128xf32> to vector<256x128xf32>
    %4 = arith.mulf %1, %3 : vector<256x128xf32>
    %c0_4 = arith.constant 0 : index
    %c0_5 = arith.constant 0 : index
    %5 = vector.load %arg4[%c0_4, %c0_5] : memref<1x128xf32, #tpu.memory_space<vmem>>, vector<1x128xf32>
    %6 = vector.broadcast %5 : vector<1x128xf32> to vector<256x128xf32>
    %7 = arith.addf %4, %6 : vector<256x128xf32>
    %c0_6 = arith.constant 0 : index
    %c0_7 = arith.constant 0 : index
    %c0_8 = arith.constant 0 : index
    %8 = vector.load %arg5[%c0_6, %c0_7, %c0_8] : memref<1x256x128xf32, #tpu.memory_space<vmem>>, vector<1x256x128xf32>
    %9 = vector.shape_cast %8 : vector<1x256x128xf32> to vector<256x128xf32>
    %10 = vector.shape_cast %7 : vector<256x128xf32> to vector<1x256x128xf32>
    tpu.vector_store %arg5[%c0_6, %c0_7, %c0_8], %10 {strides = array<i32>} : memref<1x256x128xf32, #tpu.memory_space<vmem>>, vector<1x256x128xf32>,
    return
  }
  func.func @transform_0(%arg0: i32, %arg1: i32) -> (i32, i32, i32) {
    %c0_i32 = arith.constant 0 : i32
    %c0_i32_0 = arith.constant 0 : i32
    return %arg0, %arg1, %c0_i32 : i32, i32, i32
  }
  func.func @transform_1(%arg0: i32, %arg1: i32) -> (i32, i32) {
    %c0_i32 = arith.constant 0 : i32
    %c0_i32_0 = arith.constant 0 : i32
    %c0_i32_1 = arith.constant 0 : i32
    return %c0_i32, %c0_i32_0 : i32, i32
  }
  func.func @transform_2(%arg0: i32, %arg1: i32) -> (i32, i32) {
    %c0_i32 = arith.constant 0 : i32
    %c0_i32_0 = arith.constant 0 : i32
    %c0_i32_1 = arith.constant 0 : i32
    return %c0_i32, %c0_i32_0 : i32, i32
  }
  func.func @transform_3(%arg0: i32, %arg1: i32) -> (i32, i32, i32) {
    %c0_i32 = arith.constant 0 : i32
    %c0_i32_0 = arith.constant 0 : i32
    return %arg0, %arg1, %c0_i32 : i32, i32, i32
  }
}

</mosaic_0001>

<llo_original>
// kernel: conv_bn.3
$region0: #{conv_bn.3}
  #allocation0 [shape = 'u32[]', space=smem, size = 0x4, offset = 0x4, fixed_abs, tag = 'smem constant byte address 0x4 - core index']
  #allocation1 [shape = 'u32[144,128]{1,0:T(1,128)}', space=vmem, size = 0x12000, scoped, tag = 'internal scratch']
  %s0 = inlined_call_operand.vmem [shape: f32[2,256,128], index: 0, kind: input, shape index: {}, may-alias: {0,3}]
  %s1 = inlined_call_operand.vmem [shape: f32[1,128], index: 1, kind: input, shape index: {}]
  %s2 = inlined_call_operand.vmem [shape: f32[1,128], index: 2, kind: input, shape index: {}]
  %s3 = inlined_call_operand.vmem [shape: f32[2,256,128], index: 3, kind: output, shape index: {}, may-alias: {0,3}]
  %s4 = sld [smem:[#allocation0]]
  $region45: #{conv_bn.3} parent=0
    _
  %s6 = ssub.s32 1, %s4
  %s7 = scalar_select 0, %s6, %s4
  loop: start=0, step=1, limit=4
  $region2: #{conv_bn.3} parent=0 // loop_pre_header
    _
  $region3: #{conv_bn.3} parent=0 // loop_header
    %s9 = sphi 0, %s13
    %p10 = scmp.ge.s32.totalorder %s9, 4
    %s16 = sphi 0, %s28
    %s17 = sphi 0, %s24
    %s18 = sphi 0, %s16
    %s19 = sphi 0, %s17
    %s20 = sphi 0, %s18
    %s21 = sphi 0, %s19
    %s33 = sphi 0, %s35
    %s36 = sphi 0, %s33
    %s37 = sphi 0, %s36
    %s53 = sphi 0, %s37
    %s57 = sphi 0, %s57
    %s59 = sphi 0, %s57
    %s60 = sphi 0, %s59
    %s74 = sphi 0, %s60
    %s78 = sphi 0, %s78
    %s80 = sphi 0, %s78
    %s81 = sphi 0, %s80
    %s95 = sphi 0, %s81
    %s103 = sphi 0, %s105
    %s106 = sphi 0, %s103
    %s107 = sphi 0, %s106
    %s123 = sphi 0, %s107
  $region4: #{conv_bn.3} parent=0 // loop_header_branch
    %12 = sbr.rel (%p10) target = $region8
  $region5: #{conv_bn.3} parent=0 // loop_body
    %s14 = ssub.s32 %s9, 1
    %s15 = ssub.s32 %s9, 2
    %s22 = sadd.s32 1, %s17
    %p23 = scmp.ge.s32.totalorder %s22, 1
    %s24 = scalar_select %p23, 0, %s22
    %s25 = sadd.s32 1, %s16
    %s26 = scalar_select %p23, %s25, %s16
    %p27 = scmp.ge.s32.totalorder %s26, 2
    %s28 = scalar_select %p27, 0, %s26
    %s29 = ssub.s32 %s16, %s28
    %s30 = ssub.s32 %s17, %s24
    %s31 = sor.u32 %s29, %s30
    %p32 = scmp.eq.s32.totalorder %s31, 0
    %s34 = sadd.s32 %s33, 1
    %s35 = scalar_select %p32, %s33, %s34
    %p38 = pneg %p32
    %p39 = scmp.eq.s32.totalorder %s9, 1
    %p40 = por %p38, %p39
    %p41 = scmp.ne.s32.totalorder %s33, %s36
    %p42 = scmp.eq.s32.totalorder %s9, 0
    %p43 = por %p41, %p42
    %p44 = scmp.ne.s32.totalorder %s33, %s36
    %p45 = scmp.eq.s32.totalorder %s14, 1
    %p46 = por %p44, %p45
    %p47 = scmp.ne.s32.totalorder %s36, %s37
    %p48 = scmp.eq.s32.totalorder %s14, 0
    %p49 = por %p47, %p48
    %p50 = scmp.ne.s32.totalorder %s36, %s37
    %p51 = scmp.eq.s32.totalorder %s15, 1
    %p52 = por %p50, %p51
    %p54 = scmp.ne.s32.totalorder %s37, %s53
    %p55 = scmp.eq.s32.totalorder %s15, 0
    %p56 = por %p54, %p55
    %s58 = sadd.s32 %s57, 1
    %p61 = scmp.eq.s32.totalorder %s9, 1
    %p62 = scmp.ne.s32.totalorder %s57, %s59
    %p63 = scmp.eq.s32.totalorder %s9, 0
    %p64 = por %p62, %p63
    %p65 = scmp.ne.s32.totalorder %s57, %s59
    %p66 = scmp.eq.s32.totalorder %s14, 1
    %p67 = por %p65, %p66
    %p68 = scmp.ne.s32.totalorder %s59, %s60
    %p69 = scmp.eq.s32.totalorder %s14, 0
    %p70 = por %p68, %p69
    %p71 = scmp.ne.s32.totalorder %s59, %s60
    %p72 = scmp.eq.s32.totalorder %s15, 1
    %p73 = por %p71, %p72
    %p75 = scmp.ne.s32.totalorder %s60, %s74
    %p76 = scmp.eq.s32.totalorder %s15, 0
    %p77 = por %p75, %p76
    %s79 = sadd.s32 %s78, 1
    %p82 = scmp.eq.s32.totalorder %s9, 1
    %p83 = scmp.ne.s32.totalorder %s78, %s80
    %p84 = scmp.eq.s32.totalorder %s9, 0
    %p85 = por %p83, %p84
    %p86 = scmp.ne.s32.totalorder %s78, %s80
    %p87 = scmp.eq.s32.totalorder %s14, 1
    %p88 = por %p86, %p87
    %p89 = scmp.ne.s32.totalorder %s80, %s81
    %p90 = scmp.eq.s32.totalorder %s14, 0
    %p91 = por %p89, %p90
    %p92 = scmp.ne.s32.totalorder %s80, %s81
    %p93 = scmp.eq.s32.totalorder %s15, 1
    %p94 = por %p92, %p93
    %p96 = scmp.ne.s32.totalorder %s81, %s95
    %p97 = scmp.eq.s32.totalorder %s15, 0
    %p98 = por %p96, %p97
    %s99 = ssub.s32 %s16, %s28
    %s100 = ssub.s32 %s17, %s24
    %s101 = sor.u32 %s99, %s100
    %p102 = scmp.eq.s32.totalorder %s101, 0
    %s104 = sadd.s32 %s103, 1
    %s105 = scalar_select %p102, %s103, %s104
    %p108 = pneg %p102
    %p109 = scmp.eq.s32.totalorder %s9, 1
    %p110 = por %p108, %p109
    %p111 = scmp.ne.s32.totalorder %s103, %s106
    %p112 = scmp.eq.s32.totalorder %s9, 0
    %p113 = por %p111, %p112
    %p114 = scmp.ne.s32.totalorder %s103, %s106
    %p115 = scmp.eq.s32.totalorder %s14, 1
    %p116 = por %p114, %p115
    %p117 = scmp.ne.s32.totalorder %s106, %s107
    %p118 = scmp.eq.s32.totalorder %s14, 0
    %p119 = por %p117, %p118
    %p120 = scmp.ne.s32.totalorder %s106, %s107
    %p121 = scmp.eq.s32.totalorder %s15, 1
    %p122 = por %p120, %p121
    %p124 = scmp.ne.s32.totalorder %s107, %s123
    %p125 = scmp.eq.s32.totalorder %s15, 0
    %p126 = por %p124, %p125
    %p127 = scmp.le.s32.totalorder 1, %s9
    %p128 = scmp.lt.s32.totalorder %s9, 3
    %p129 = pnand %p127, %p128
    %p130 = pneg %p129
    // Predicated region
    $region9: #{conv_bn.3} parent=5 // pred_check
      _
    $region10: #{conv_bn.3} parent=5 // pred_check_branch
      %132 = sbr.rel (%p129) target = $region12
    $region11: #{conv_bn.3} parent=5 // pred_region
      %s133 = ssub.s32 %s9, 1
      // Predicated region
      $region13: #{conv_bn.3} parent=11 // pred_check
        %p134 = pneg %p70
      $region14: #{conv_bn.3} parent=11 // pred_check_branch
        %136 = sbr.rel (%p134) target = $region16
      $region15: #{conv_bn.3} parent=11 // pred_region
        _
      $region16: #{conv_bn.3} parent=11 // pred_fallthru
        _
      // Predicated region
      $region17: #{conv_bn.3} parent=11 // pred_check
        %p137 = pneg %p91
      $region18: #{conv_bn.3} parent=11 // pred_check_branch
        %139 = sbr.rel (%p137) target = $region20
      $region19: #{conv_bn.3} parent=11 // pred_region
        _
      $region20: #{conv_bn.3} parent=11 // pred_fallthru
        _
    $region12: #{conv_bn.3} parent=5 // pred_fallthru
      _
    %p140 = scmp.lt.s32.totalorder %s9, 2
    // Predicated region
    $region21: #{conv_bn.3} parent=5 // pred_check
      %p141 = pneg %p140
    $region22: #{conv_bn.3} parent=5 // pred_check_branch
      %143 = sbr.rel (%p141) target = $region24
    $region23: #{conv_bn.3} parent=5 // pred_region
      // Predicated region
      $region25: #{conv_bn.3} parent=23 // pred_check
        %p144 = pneg %p43
      $region26: #{conv_bn.3} parent=23 // pred_check_branch
        %146 = sbr.rel (%p144) target = $region28
      $region27: #{conv_bn.3} parent=23 // pred_region
        %s147 = smul.u32 32, %s17
        %p148 = scmp.lt.s32.totalorder %s16, 1
        %s149 = scalar_select %p148, %s16, 1
        %p150 = scmp.lt.s32.totalorder %s147, 31
        %s151 = scalar_select %p150, %s147, 31
        %s152 = smul.addr %s149, 32
        %s153 = sadd.s32 %s151, %s152
        %s154 = smul.addr %s153, 8
        %s155 = scalar_lea.vmem %s0, %s154
        %s156 = smul.u32 32, %s17
      $region28: #{conv_bn.3} parent=23 // pred_fallthru
        _
    $region24: #{conv_bn.3} parent=5 // pred_fallthru
      _
    %p157 = scmp.le.s32.totalorder 1, %s9
    %p158 = scmp.lt.s32.totalorder %s9, 3
    %p159 = pnand %p157, %p158
    %p160 = pneg %p159
    // Predicated region
    $region29: #{conv_bn.3} parent=5 // pred_check
      _
    $region30: #{conv_bn.3} parent=5 // pred_check_branch
      %162 = sbr.rel (%p159) target = $region32
    $region31: #{conv_bn.3} parent=5 // pred_region
      %s163 = ssub.s32 %s9, 1
      %s164 = smul.u32 32, %s19
      %p165 = scmp.lt.s32.totalorder %s18, 1
      %s166 = scalar_select %p165, %s18, 1
      %p167 = scmp.lt.s32.totalorder %s164, 31
      %s168 = scalar_select %p167, %s164, 31
      %s169 = smul.addr %s166, 32
      %s170 = sadd.s32 %s168, %s169
      %s171 = smul.addr %s170, 8
      %s172 = scalar_lea.vmem %s0, %s171
      %p173 = pneg %p49
      %p174 = pneg %p46
      %p175 = pneg %p70
      %p176 = pneg %p67
      %p177 = pneg %p91
      %p178 = pneg %p88
      %p179 = pneg %p119
      %p180 = pneg %p116
      %s181 = smul.u32 32, %s19
      %p182 = scmp.lt.s32.totalorder %s18, 1
      %s183 = scalar_select %p182, %s18, 1
      %p184 = scmp.lt.s32.totalorder %s181, 31
      %s185 = scalar_select %p184, %s181, 31
      %s186 = smul.addr %s183, 32
      %s187 = sadd.s32 %s185, %s186
      %s188 = smul.addr %s187, 8
      %s189 = scalar_lea.vmem %s3, %s188
      %s190 = smul.u32 32, %s19
      %p191 = scmp.lt.s32.totalorder %s18, 1
      %s192 = scalar_select %p191, %s18, 1
      %p193 = scmp.lt.s32.totalorder %s190, 31
      %s194 = scalar_select %p193, %s190, 31
      %s195 = smul.addr %s192, 32
      %s196 = sadd.s32 %s194, %s195
      %s197 = smul.addr %s196, 8
      %s198 = scalar_lea.vmem %s0, %s197
      %s199 = smul.u32 32, %s19
      %s200 = smul.u32 32, %s19
      %p201 = scmp.lt.s32.totalorder %s18, 1
      %s202 = scalar_select %p201, %s18, 1
      %p203 = scmp.lt.s32.totalorder %s200, 31
      %s204 = scalar_select %p203, %s200, 31
      %s205 = smul.addr %s202, 32
      %s206 = sadd.s32 %s204, %s205
      %s207 = smul.addr %s206, 8
      %s208 = scalar_lea.vmem %s3, %s207
      %s209 = smul.u32 32, %s19
      %v210 = vld [vmem:[%s198] sm:$0xff]
      %v211 = vld [vmem:[%s198 + $0x8] sm:$0xff]
      %v212 = vld [vmem:[%s198 + $0x10] sm:$0xff]
      %v213 = vld [vmem:[%s198 + $0x18] sm:$0xff]
      %v214 = vld [vmem:[%s198 + $0x20] sm:$0xff]
      %v215 = vld [vmem:[%s198 + $0x28] sm:$0xff]
      %v216 = vld [vmem:[%s198 + $0x30] sm:$0xff]
      %v217 = vld [vmem:[%s198 + $0x38] sm:$0xff]
      %v218 = vld [vmem:[%s198 + $0x40] sm:$0xff]
      %v219 = vld [vmem:[%s198 + $0x48] sm:$0xff]
      %v220 = vld [vmem:[%s198 + $0x50] sm:$0xff]
      %v221 = vld [vmem:[%s198 + $0x58] sm:$0xff]
      %v222 = vld [vmem:[%s198 + $0x60] sm:$0xff]
      %v223 = vld [vmem:[%s198 + $0x68] sm:$0xff]
      %v224 = vld [vmem:[%s198 + $0x70] sm:$0xff]
      %v225 = vld [vmem:[%s198 + $0x78] sm:$0xff]
      %v226 = vld [vmem:[%s198 + $0x80] sm:$0xff]
      %v227 = vld [vmem:[%s198 + $0x88] sm:$0xff]
      %v228 = vld [vmem:[%s198 + $0x90] sm:$0xff]
      %v229 = vld [vmem:[%s198 + $0x98] sm:$0xff]
      %v230 = vld [vmem:[%s198 + $0xa0] sm:$0xff]
      %v231 = vld [vmem:[%s198 + $0xa8] sm:$0xff]
      %v232 = vld [vmem:[%s198 + $0xb0] sm:$0xff]
      %v233 = vld [vmem:[%s198 + $0xb8] sm:$0xff]
      %v234 = vld [vmem:[%s198 + $0xc0] sm:$0xff]
      %v235 = vld [vmem:[%s198 + $0xc8] sm:$0xff]
      %v236 = vld [vmem:[%s198 + $0xd0] sm:$0xff]
      %v237 = vld [vmem:[%s198 + $0xd8] sm:$0xff]
      %v238 = vld [vmem:[%s198 + $0xe0] sm:$0xff]
      %v239 = vld [vmem:[%s198 + $0xe8] sm:$0xff]
      %v240 = vld [vmem:[%s198 + $0xf0] sm:$0xff]
      %v241 = vld [vmem:[%s198 + $0xf8] sm:$0xff]
      %v242 = vld [vmem:[%s1] sm:$0x1]
      %v244 = vlaneseq
      %v245 = vshrl.u32 %v244, 7
      %v246 = vsub.s32 0, %v245
      %v247 = vrot.slane %v242, %v246
      %v249 = vmul.f32 %v210, %v247
      %v250 = vmul.f32 %v211, %v247
      %v251 = vmul.f32 %v212, %v247
      %v252 = vmul.f32 %v213, %v247
      %v253 = vmul.f32 %v214, %v247
      %v254 = vmul.f32 %v215, %v247
      %v255 = vmul.f32 %v216, %v247
      %v256 = vmul.f32 %v217, %v247
      %v257 = vmul.f32 %v218, %v247
      %v258 = vmul.f32 %v219, %v247
      %v259 = vmul.f32 %v220, %v247
      %v260 = vmul.f32 %v221, %v247
      %v261 = vmul.f32 %v222, %v247
      %v262 = vmul.f32 %v223, %v247
      %v263 = vmul.f32 %v224, %v247
      %v264 = vmul.f32 %v225, %v247
      %v265 = vmul.f32 %v226, %v247
      %v266 = vmul.f32 %v227, %v247
      %v267 = vmul.f32 %v228, %v247
      %v268 = vmul.f32 %v229, %v247
      %v269 = vmul.f32 %v230, %v247
      %v270 = vmul.f32 %v231, %v247
      %v271 = vmul.f32 %v232, %v247
      %v272 = vmul.f32 %v233, %v247
      %v273 = vmul.f32 %v234, %v247
      %v274 = vmul.f32 %v235, %v247
      %v275 = vmul.f32 %v236, %v247
      %v276 = vmul.f32 %v237, %v247
      %v277 = vmul.f32 %v238, %v247
      %v278 = vmul.f32 %v239, %v247
      %v279 = vmul.f32 %v240, %v247
      %v280 = vmul.f32 %v241, %v247
      %v281 = vld [vmem:[%s2] sm:$0x1]
      %v283 = vlaneseq
      %v284 = vshrl.u32 %v283, 7
      %v285 = vsub.s32 0, %v284
      %v286 = vrot.slane %v281, %v285
      %v288 = vadd.f32 %v249, %v286
      %v289 = vadd.f32 %v250, %v286
      %v290 = vadd.f32 %v251, %v286
      %v291 = vadd.f32 %v252, %v286
      %v292 = vadd.f32 %v253, %v286
      %v293 = vadd.f32 %v254, %v286
      %v294 = vadd.f32 %v255, %v286
      %v295 = vadd.f32 %v256, %v286
      %v296 = vadd.f32 %v257, %v286
      %v297 = vadd.f32 %v258, %v286
      %v298 = vadd.f32 %v259, %v286
      %v299 = vadd.f32 %v260, %v286
      %v300 = vadd.f32 %v261, %v286
      %v301 = vadd.f32 %v262, %v286
      %v302 = vadd.f32 %v263, %v286
      %v303 = vadd.f32 %v264, %v286
      %v304 = vadd.f32 %v265, %v286
      %v305 = vadd.f32 %v266, %v286
      %v306 = vadd.f32 %v267, %v286
      %v307 = vadd.f32 %v268, %v286
      %v308 = vadd.f32 %v269, %v286
      %v309 = vadd.f32 %v270, %v286
      %v310 = vadd.f32 %v271, %v286
      %v311 = vadd.f32 %v272, %v286
      %v312 = vadd.f32 %v273, %v286
      %v313 = vadd.f32 %v274, %v286
      %v314 = vadd.f32 %v275, %v286
      %v315 = vadd.f32 %v276, %v286
      %v316 = vadd.f32 %v277, %v286
      %v317 = vadd.f32 %v278, %v286
      %v318 = vadd.f32 %v279, %v286
      %v319 = vadd.f32 %v280, %v286
      %320 = vst [vmem:[%s208] sm:$0xff] %v288
      %321 = vst [vmem:[%s208 + $0x8] sm:$0xff] %v289
      %322 = vst [vmem:[%s208 + $0x10] sm:$0xff] %v290
      %323 = vst [vmem:[%s208 + $0x18] sm:$0xff] %v291
      %324 = vst [vmem:[%s208 + $0x20] sm:$0xff] %v292
      %325 = vst [vmem:[%s208 + $0x28] sm:$0xff] %v293
      %326 = vst [vmem:[%s208 + $0x30] sm:$0xff] %v294
      %327 = vst [vmem:[%s208 + $0x38] sm:$0xff] %v295
      %328 = vst [vmem:[%s208 + $0x40] sm:$0xff] %v296
      %329 = vst [vmem:[%s208 + $0x48] sm:$0xff] %v297
      %330 = vst [vmem:[%s208 + $0x50] sm:$0xff] %v298
      %331 = vst [vmem:[%s208 + $0x58] sm:$0xff] %v299
      %332 = vst [vmem:[%s208 + $0x60] sm:$0xff] %v300
      %333 = vst [vmem:[%s208 + $0x68] sm:$0xff] %v301
      %334 = vst [vmem:[%s208 + $0x70] sm:$0xff] %v302
      %335 = vst [vmem:[%s208 + $0x78] sm:$0xff] %v303
      %336 = vst [vmem:[%s208 + $0x80] sm:$0xff] %v304
      %337 = vst [vmem:[%s208 + $0x88] sm:$0xff] %v305
      %338 = vst [vmem:[%s208 + $0x90] sm:$0xff] %v306
      %339 = vst [vmem:[%s208 + $0x98] sm:$0xff] %v307
      %340 = vst [vmem:[%s208 + $0xa0] sm:$0xff] %v308
      %341 = vst [vmem:[%s208 + $0xa8] sm:$0xff] %v309
      %342 = vst [vmem:[%s208 + $0xb0] sm:$0xff] %v310
      %343 = vst [vmem:[%s208 + $0xb8] sm:$0xff] %v311
      %344 = vst [vmem:[%s208 + $0xc0] sm:$0xff] %v312
      %345 = vst [vmem:[%s208 + $0xc8] sm:$0xff] %v313
      %346 = vst [vmem:[%s208 + $0xd0] sm:$0xff] %v314
      %347 = vst [vmem:[%s208 + $0xd8] sm:$0xff] %v315
      %348 = vst [vmem:[%s208 + $0xe0] sm:$0xff] %v316
      %349 = vst [vmem:[%s208 + $0xe8] sm:$0xff] %v317
      %350 = vst [vmem:[%s208 + $0xf0] sm:$0xff] %v318
      %351 = vst [vmem:[%s208 + $0xf8] sm:$0xff] %v319
      %s352 = smul.u32 32, %s19
      %p353 = scmp.lt.s32.totalorder %s18, 1
      %s354 = scalar_select %p353, %s18, 1
      %p355 = scmp.lt.s32.totalorder %s352, 31
      %s356 = scalar_select %p355, %s352, 31
      %s357 = smul.addr %s354, 32
      %s358 = sadd.s32 %s356, %s357
      %s359 = smul.addr %s358, 8
      %s360 = scalar_lea.vmem %s3, %s359
      // Predicated region
      $region33: #{conv_bn.3} parent=31 // pred_check
        %p361 = pneg %p116
      $region34: #{conv_bn.3} parent=31 // pred_check_branch
        %363 = sbr.rel (%p361) target = $region36
      $region35: #{conv_bn.3} parent=31 // pred_region
        %s364 = smul.u32 32, %s19
      $region36: #{conv_bn.3} parent=31 // pred_fallthru
        _
    $region32: #{conv_bn.3} parent=5 // pred_fallthru
      _
    %p365 = scmp.le.s32.totalorder 2, %s9
    // Predicated region
    $region37: #{conv_bn.3} parent=5 // pred_check
      %p366 = pneg %p365
    $region38: #{conv_bn.3} parent=5 // pred_check_branch
      %368 = sbr.rel (%p366) target = $region40
    $region39: #{conv_bn.3} parent=5 // pred_region
      %s369 = ssub.s32 %s9, 2
      // Predicated region
      $region41: #{conv_bn.3} parent=39 // pred_check
        %p370 = pneg %p122
      $region42: #{conv_bn.3} parent=39 // pred_check_branch
        %372 = sbr.rel (%p370) target = $region44
      $region43: #{conv_bn.3} parent=39 // pred_region
        %s373 = smul.u32 32, %s21
        %p374 = scmp.lt.s32.totalorder %s20, 1
        %s375 = scalar_select %p374, %s20, 1
        %p376 = scmp.lt.s32.totalorder %s373, 31
        %s377 = scalar_select %p376, %s373, 31
        %s378 = smul.addr %s375, 32
        %s379 = sadd.s32 %s377, %s378
        %s380 = smul.addr %s379, 8
        %s381 = scalar_lea.vmem %s3, %s380
      $region44: #{conv_bn.3} parent=39 // pred_fallthru
        _
    $region40: #{conv_bn.3} parent=5 // pred_fallthru
      _
  $region6: #{conv_bn.3} parent=0 // loop_footer
    %s13 = sadd.s32 1, %s9
  $region7: #{conv_bn.3} parent=0 // loop_footer_branch
    %8 = sbr.rel target = $region3
  $region8: #{conv_bn.3} parent=0 // loop_exit
    _

// kernel: conv_bn.2
$region0: #{conv_bn.2}
  #allocation0 [shape = 'u32[]', space=smem, size = 0x4, offset = 0x4, fixed_abs, tag = 'smem constant byte address 0x4 - core index']
  #allocation1 [shape = 'u32[144,128]{1,0:T(1,128)}', space=vmem, size = 0x12000, scoped, tag = 'internal scratch']
  %s0 = inlined_call_operand.vmem [shape: bf16[2,18,16,12], index: 0, kind: input, shape index: {}]
  %s1 = inlined_call_operand.vmem [shape: bf16[3,12,128], index: 1, kind: input, shape index: {}]
  %s2 = inlined_call_operand.vmem [shape: f32[2,256,128], index: 2, kind: output, shape index: {0}]
  %s3 = inlined_call_operand.vmem [shape: f32[2,1,1,128], index: 3, kind: output, shape index: {1}]
  %s4 = inlined_call_operand.vmem [shape: f32[2,1,1,128], index: 4, kind: output, shape index: {2}]
  %5 = xla_tuple %s2, %s3, %s4
  %s6 = sld [smem:[#allocation0]]
  $region57: #{conv_bn.2} parent=0
    _
  %s8 = ssub.s32 1, %s6
  %s9 = scalar_select 0, %s8, %s6
  loop: start=0, step=1, limit=4
  $region2: #{conv_bn.2} parent=0 // loop_pre_header
    _
  $region3: #{conv_bn.2} parent=0 // loop_header
    %s11 = sphi 0, %s15
    %p12 = scmp.ge.s32.totalorder %s11, 4
    %s18 = sphi 0, %s30
    %s19 = sphi 0, %s26
    %s20 = sphi 0, %s18
    %s21 = sphi 0, %s19
    %s22 = sphi 0, %s20
    %s23 = sphi 0, %s21
    %s33 = sphi 0, %s35
    %s36 = sphi 0, %s33
    %s37 = sphi 0, %s36
    %s53 = sphi 0, %s37
    %s57 = sphi 0, %s57
    %s59 = sphi 0, %s57
    %s60 = sphi 0, %s59
    %s74 = sphi 0, %s60
    %s82 = sphi 0, %s84
    %s85 = sphi 0, %s82
    %s86 = sphi 0, %s85
    %s102 = sphi 0, %s86
    %s110 = sphi 0, %s112
    %s113 = sphi 0, %s110
    %s114 = sphi 0, %s113
    %s130 = sphi 0, %s114
    %s138 = sphi 0, %s140
    %s141 = sphi 0, %s138
    %s142 = sphi 0, %s141
    %s158 = sphi 0, %s142
  $region4: #{conv_bn.2} parent=0 // loop_header_branch
    %14 = sbr.rel (%p12) target = $region8
  $region5: #{conv_bn.2} parent=0 // loop_body
    %s16 = ssub.s32 %s11, 1
    %s17 = ssub.s32 %s11, 2
    %s24 = sadd.s32 1, %s19
    %p25 = scmp.ge.s32.totalorder %s24, 1
    %s26 = scalar_select %p25, 0, %s24
    %s27 = sadd.s32 1, %s18
    %s28 = scalar_select %p25, %s27, %s18
    %p29 = scmp.ge.s32.totalorder %s28, 2
    %s30 = scalar_select %p29, 0, %s28
    %s31 = ssub.s32 %s18, %s30
    %p32 = scmp.eq.s32.totalorder %s31, 0
    %s34 = sadd.s32 %s33, 1
    %s35 = scalar_select %p32, %s33, %s34
    %p38 = pneg %p32
    %p39 = scmp.eq.s32.totalorder %s11, 1
    %p40 = por %p38, %p39
    %p41 = scmp.ne.s32.totalorder %s33, %s36
    %p42 = scmp.eq.s32.totalorder %s11, 0
    %p43 = por %p41, %p42
    %p44 = scmp.ne.s32.totalorder %s33, %s36
    %p45 = scmp.eq.s32.totalorder %s16, 1
    %p46 = por %p44, %p45
    %p47 = scmp.ne.s32.totalorder %s36, %s37
    %p48 = scmp.eq.s32.totalorder %s16, 0
    %p49 = por %p47, %p48
    %p50 = scmp.ne.s32.totalorder %s36, %s37
    %p51 = scmp.eq.s32.totalorder %s17, 1
    %p52 = por %p50, %p51
    %p54 = scmp.ne.s32.totalorder %s37, %s53
    %p55 = scmp.eq.s32.totalorder %s17, 0
    %p56 = por %p54, %p55
    %s58 = sadd.s32 %s57, 1
    %p61 = scmp.eq.s32.totalorder %s11, 1
    %p62 = scmp.ne.s32.totalorder %s57, %s59
    %p63 = scmp.eq.s32.totalorder %s11, 0
    %p64 = por %p62, %p63
    %p65 = scmp.ne.s32.totalorder %s57, %s59
    %p66 = scmp.eq.s32.totalorder %s16, 1
    %p67 = por %p65, %p66
    %p68 = scmp.ne.s32.totalorder %s59, %s60
    %p69 = scmp.eq.s32.totalorder %s16, 0
    %p70 = por %p68, %p69
    %p71 = scmp.ne.s32.totalorder %s59, %s60
    %p72 = scmp.eq.s32.totalorder %s17, 1
    %p73 = por %p71, %p72
    %p75 = scmp.ne.s32.totalorder %s60, %s74
    %p76 = scmp.eq.s32.totalorder %s17, 0
    %p77 = por %p75, %p76
    %s78 = ssub.s32 %s18, %s30
    %s79 = ssub.s32 %s19, %s26
    %s80 = sor.u32 %s78, %s79
    %p81 = scmp.eq.s32.totalorder %s80, 0
    %s83 = sadd.s32 %s82, 1
    %s84 = scalar_select %p81, %s82, %s83
    %p87 = pneg %p81
    %p88 = scmp.eq.s32.totalorder %s11, 1
    %p89 = por %p87, %p88
    %p90 = scmp.ne.s32.totalorder %s82, %s85
    %p91 = scmp.eq.s32.totalorder %s11, 0
    %p92 = por %p90, %p91
    %p93 = scmp.ne.s32.totalorder %s82, %s85
    %p94 = scmp.eq.s32.totalorder %s16, 1
    %p95 = por %p93, %p94
    %p96 = scmp.ne.s32.totalorder %s85, %s86
    %p97 = scmp.eq.s32.totalorder %s16, 0
    %p98 = por %p96, %p97
    %p99 = scmp.ne.s32.totalorder %s85, %s86
    %p100 = scmp.eq.s32.totalorder %s17, 1
    %p101 = por %p99, %p100
    %p103 = scmp.ne.s32.totalorder %s86, %s102
    %p104 = scmp.eq.s32.totalorder %s17, 0
    %p105 = por %p103, %p104
    %s106 = ssub.s32 %s18, %s30
    %s107 = ssub.s32 %s19, %s26
    %s108 = sor.u32 %s106, %s107
    %p109 = scmp.eq.s32.totalorder %s108, 0
    %s111 = sadd.s32 %s110, 1
    %s112 = scalar_select %p109, %s110, %s111
    %p115 = pneg %p109
    %p116 = scmp.eq.s32.totalorder %s11, 1
    %p117 = por %p115, %p116
    %p118 = scmp.ne.s32.totalorder %s110, %s113
    %p119 = scmp.eq.s32.totalorder %s11, 0
    %p120 = por %p118, %p119
    %p121 = scmp.ne.s32.totalorder %s110, %s113
    %p122 = scmp.eq.s32.totalorder %s16, 1
    %p123 = por %p121, %p122
    %p124 = scmp.ne.s32.totalorder %s113, %s114
    %p125 = scmp.eq.s32.totalorder %s16, 0
    %p126 = por %p124, %p125
    %p127 = scmp.ne.s32.totalorder %s113, %s114
    %p128 = scmp.eq.s32.totalorder %s17, 1
    %p129 = por %p127, %p128
    %p131 = scmp.ne.s32.totalorder %s114, %s130
    %p132 = scmp.eq.s32.totalorder %s17, 0
    %p133 = por %p131, %p132
    %s134 = ssub.s32 %s18, %s30
    %s135 = ssub.s32 %s19, %s26
    %s136 = sor.u32 %s134, %s135
    %p137 = scmp.eq.s32.totalorder %s136, 0
    %s139 = sadd.s32 %s138, 1
    %s140 = scalar_select %p137, %s138, %s139
    %p143 = pneg %p137
    %p144 = scmp.eq.s32.totalorder %s11, 1
    %p145 = por %p143, %p144
    %p146 = scmp.ne.s32.totalorder %s138, %s141
    %p147 = scmp.eq.s32.totalorder %s11, 0
    %p148 = por %p146, %p147
    %p149 = scmp.ne.s32.totalorder %s138, %s141
    %p150 = scmp.eq.s32.totalorder %s16, 1
    %p151 = por %p149, %p150
    %p152 = scmp.ne.s32.totalorder %s141, %s142
    %p153 = scmp.eq.s32.totalorder %s16, 0
    %p154 = por %p152, %p153
    %p155 = scmp.ne.s32.totalorder %s141, %s142
    %p156 = scmp.eq.s32.totalorder %s17, 1
    %p157 = por %p155, %p156
    %p159 = scmp.ne.s32.totalorder %s142, %s158
    %p160 = scmp.eq.s32.totalorder %s17, 0
    %p161 = por %p159, %p160
    %p162 = scmp.le.s32.totalorder 1, %s11
    %p163 = scmp.lt.s32.totalorder %s11, 3
    %p164 = pnand %p162, %p163
    %p165 = pneg %p164
    // Predicated region
    $region9: #{conv_bn.2} parent=5 // pred_check
      _
    $region10: #{conv_bn.2} parent=5 // pred_check_branch
      %167 = sbr.rel (%p164) target = $region12
    $region11: #{conv_bn.2} parent=5 // pred_region
      %s168 = ssub.s32 %s11, 1
      // Predicated region
      $region13: #{conv_bn.2} parent=11 // pred_check
        %p169 = pneg %p70
      $region14: #{conv_bn.2} parent=11 // pred_check_branch
        %171 = sbr.rel (%p169) target = $region16
      $region15: #{conv_bn.2} parent=11 // pred_region
        _
      $region16: #{conv_bn.2} parent=11 // pred_fallthru
        _
    $region12: #{conv_bn.2} parent=5 // pred_fallthru
      _
    %p172 = scmp.lt.s32.totalorder %s11, 2
    // Predicated region
    $region17: #{conv_bn.2} parent=5 // pred_check
      %p173 = pneg %p172
    $region18: #{conv_bn.2} parent=5 // pred_check_branch
      %175 = sbr.rel (%p173) target = $region20
    $region19: #{conv_bn.2} parent=5 // pred_region
      // Predicated region
      $region21: #{conv_bn.2} parent=19 // pred_check
        %p176 = pneg %p43
      $region22: #{conv_bn.2} parent=19 // pred_check_branch
        %178 = sbr.rel (%p176) target = $region24
      $region23: #{conv_bn.2} parent=19 // pred_region
        %p179 = scmp.lt.s32.totalorder %s18, 1
        %s180 = scalar_select %p179, %s18, 1
        %s181 = smul.addr %s180, 36
        %s182 = smul.addr %s181, 4
        %s183 = scalar_lea.vmem %s0, %s182
      $region24: #{conv_bn.2} parent=19 // pred_fallthru
        _
    $region20: #{conv_bn.2} parent=5 // pred_fallthru
      _
    %p184 = scmp.le.s32.totalorder 1, %s11
    %p185 = scmp.lt.s32.totalorder %s11, 3
    %p186 = pnand %p184, %p185
    %p187 = pneg %p186
    // Predicated region
    $region25: #{conv_bn.2} parent=5 // pred_check
      _
    $region26: #{conv_bn.2} parent=5 // pred_check_branch
      %189 = sbr.rel (%p186) target = $region28
    $region27: #{conv_bn.2} parent=5 // pred_region
      %s190 = ssub.s32 %s11, 1
      %p191 = scmp.lt.s32.totalorder %s20, 1
      %s192 = scalar_select %p191, %s20, 1
      %s193 = smul.addr %s192, 36
      %s194 = smul.addr %s193, 4
      %s195 = scalar_lea.vmem %s0, %s194
      %p196 = pneg %p49
      %p197 = pneg %p46
      %p198 = pneg %p70
      %p199 = pneg %p67
      %p200 = pneg %p98
      %p201 = pneg %p95
      %s202 = smul.u32 32, %s21
      %p203 = scmp.lt.s32.totalorder %s20, 1
      %s204 = scalar_select %p203, %s20, 1
      %p205 = scmp.lt.s32.totalorder %s202, 31
      %s206 = scalar_select %p205, %s202, 31
      %s207 = smul.addr %s204, 32
      %s208 = sadd.s32 %s206, %s207
      %s209 = smul.addr %s208, 8
      %s210 = scalar_lea.vmem %s2, %s209
      %p211 = pneg %p126
      %p212 = pneg %p123
      %p213 = scmp.lt.s32.totalorder %s20, 1
      %s214 = scalar_select %p213, %s20, 1
      %p215 = scmp.lt.s32.totalorder %s21, 0
      %s216 = scalar_select %p215, %s21, 0
      %s217 = sadd.s32 %s216, %s214
      %s218 = scalar_lea.vmem %s3, %s217
      %p219 = pneg %p154
      %p220 = pneg %p151
      %p221 = scmp.lt.s32.totalorder %s20, 1
      %s222 = scalar_select %p221, %s20, 1
      %p223 = scmp.lt.s32.totalorder %s21, 0
      %s224 = scalar_select %p223, %s21, 0
      %s225 = sadd.s32 %s224, %s222
      %s226 = scalar_lea.vmem %s4, %s225
      %p227 = scmp.lt.s32.totalorder %s20, 1
      %s228 = scalar_select %p227, %s20, 1
      %s229 = smul.addr %s228, 36
      %s230 = smul.addr %s229, 4
      %s231 = scalar_lea.vmem %s0, %s230
      %s232 = smul.u32 32, %s21
      %p233 = scmp.lt.s32.totalorder %s20, 1
      %s234 = scalar_select %p233, %s20, 1
      %p235 = scmp.lt.s32.totalorder %s232, 31
      %s236 = scalar_select %p235, %s232, 31
      %s237 = smul.addr %s234, 32
      %s238 = sadd.s32 %s236, %s237
      %s239 = smul.addr %s238, 8
      %s240 = scalar_lea.vmem %s2, %s239
      %s241 = smul.u32 32, %s21
      %p242 = scmp.lt.s32.totalorder %s20, 1
      %s243 = scalar_select %p242, %s20, 1
      %p244 = scmp.lt.s32.totalorder %s21, 0
      %s245 = scalar_select %p244, %s21, 0
      %s246 = sadd.s32 %s245, %s243
      %s247 = scalar_lea.vmem %s3, %s246
      %p248 = scmp.lt.s32.totalorder %s20, 1
      %s249 = scalar_select %p248, %s20, 1
      %p250 = scmp.lt.s32.totalorder %s21, 0
      %s251 = scalar_select %p250, %s21, 0
      %s252 = sadd.s32 %s251, %s249
      %s253 = scalar_lea.vmem %s4, %s252
      %s255 = smul.u32 %s21, 16
      %s256 = smul.u32 %s255, 2
      %s257 = smul.addr %s256, 4
      %s258 = scalar_lea.vmem %s231, %s257
      %v259 = vld [vmem:[%s258] sm:$0xf]
      %v260 = vld [vmem:[%s258 + $0x4] sm:$0xf]
      %v261 = vld [vmem:[%s258 + $0x8] sm:$0xf]
      %v262 = vld [vmem:[%s258 + $0xc] sm:$0xf]
      %v263 = vld [vmem:[%s258 + $0x10] sm:$0xf]
      %v264 = vld [vmem:[%s258 + $0x14] sm:$0xf]
      %v265 = vld [vmem:[%s258 + $0x18] sm:$0xf]
      %v266 = vld [vmem:[%s258 + $0x1c] sm:$0xf]
      %v267 = vld [vmem:[%s258 + $0x20] sm:$0xf]
      %v268 = vld [vmem:[%s258 + $0x24] sm:$0xf]
      %v269 = vld [vmem:[%s258 + $0x28] sm:$0xf]
      %v270 = vld [vmem:[%s258 + $0x2c] sm:$0xf]
      %v271 = vld [vmem:[%s258 + $0x30] sm:$0xf]
      %v272 = vld [vmem:[%s258 + $0x34] sm:$0xf]
      %v273 = vld [vmem:[%s258 + $0x38] sm:$0xf]
      %v274 = vld [vmem:[%s258 + $0x3c] sm:$0xf]
      %v275 = vld [vmem:[%s258 + $0x40] sm:$0xf]
      %v276 = vld [vmem:[%s258 + $0x44] sm:$0xf]
      %v277 = vld [vmem:[%s258 + $0x48] sm:$0xf]
      %v278 = vld [vmem:[%s258 + $0x4c] sm:$0xf]
      %v279 = vld [vmem:[%s258 + $0x50] sm:$0xf]
      %v280 = vld [vmem:[%s258 + $0x54] sm:$0xf]
      %v281 = vld [vmem:[%s258 + $0x58] sm:$0xf]
      %v282 = vld [vmem:[%s258 + $0x5c] sm:$0xf]
      %v283 = vld [vmem:[%s258 + $0x60] sm:$0xf]
      %v284 = vld [vmem:[%s258 + $0x64] sm:$0xf]
      %v285 = vld [vmem:[%s258 + $0x68] sm:$0xf]
      %v286 = vld [vmem:[%s258 + $0x6c] sm:$0xf]
      %v287 = vld [vmem:[%s258 + $0x70] sm:$0xf]
      %v288 = vld [vmem:[%s258 + $0x74] sm:$0xf]
      %v289 = vld [vmem:[%s258 + $0x78] sm:$0xf]
      %v290 = vld [vmem:[%s258 + $0x7c] sm:$0xf]
      %v291 = vld [vmem:[%s1] sm:$0xf]
      %v292 = vld [vmem:[%s1 + $0x4] sm:$0x3]
      %v325 = vunpack.c.l.b16 %v259
      %v326 = vunpack.c.l.b16 %v260
      %v327 = vunpack.c.l.b16 %v261
      %v328 = vunpack.c.l.b16 %v262
      %v329 = vunpack.c.l.b16 %v263
      %v330 = vunpack.c.l.b16 %v264
      %v331 = vunpack.c.l.b16 %v265
      %v332 = vunpack.c.l.b16 %v266
      %v333 = vunpack.c.l.b16 %v267
      %v334 = vunpack.c.l.b16 %v268
      %v335 = vunpack.c.l.b16 %v269
      %v336 = vunpack.c.l.b16 %v270
      %v337 = vunpack.c.l.b16 %v271
      %v338 = vunpack.c.l.b16 %v272
      %v339 = vunpack.c.l.b16 %v273
      %v340 = vunpack.c.l.b16 %v274
      %v341 = vunpack.c.l.b16 %v275
      %v342 = vunpack.c.l.b16 %v276
      %v343 = vunpack.c.l.b16 %v277
      %v344 = vunpack.c.l.b16 %v278
      %v345 = vunpack.c.l.b16 %v279
      %v346 = vunpack.c.l.b16 %v280
      %v347 = vunpack.c.l.b16 %v281
      %v348 = vunpack.c.l.b16 %v282
      %v349 = vunpack.c.l.b16 %v283
      %v350 = vunpack.c.l.b16 %v284
      %v351 = vunpack.c.l.b16 %v285
      %v352 = vunpack.c.l.b16 %v286
      %v353 = vunpack.c.l.b16 %v287
      %v354 = vunpack.c.l.b16 %v288
      %v355 = vunpack.c.l.b16 %v289
      %v356 = vunpack.c.l.b16 %v290
      %v357 = vpack.c.b16 %v326, %v325
      %v358 = vpack.c.b16 %v328, %v327
      %v359 = vpack.c.b16 %v330, %v329
      %v360 = vpack.c.b16 %v332, %v331
      %v361 = vpack.c.b16 %v334, %v333
      %v362 = vpack.c.b16 %v336, %v335
      %v363 = vpack.c.b16 %v338, %v337
      %v364 = vpack.c.b16 %v340, %v339
      %v365 = vpack.c.b16 %v342, %v341
      %v366 = vpack.c.b16 %v344, %v343
      %v367 = vpack.c.b16 %v346, %v345
      %v368 = vpack.c.b16 %v348, %v347
      %v369 = vpack.c.b16 %v350, %v349
      %v370 = vpack.c.b16 %v352, %v351
      %v371 = vpack.c.b16 %v354, %v353
      %v372 = vpack.c.b16 %v356, %v355
      %v375 = vunpack.c.l.b16 %v291
      %v376 = vunpack.c.l.b16 %v292
      %v377 = vpack.c.b16 %v376, %v375
      %vm378 = vcmask 97280
      %v380 = vsel %vm378, %v357, 0
      %v383 = vsel %vm378, %v358, 0
      %v386 = vsel %vm378, %v359, 0
      %v389 = vsel %vm378, %v360, 0
      %v392 = vsel %vm378, %v361, 0
      %v395 = vsel %vm378, %v362, 0
      %v398 = vsel %vm378, %v363, 0
      %v401 = vsel %vm378, %v364, 0
      %v404 = vsel %vm378, %v365, 0
      %v407 = vsel %vm378, %v366, 0
      %v410 = vsel %vm378, %v367, 0
      %v413 = vsel %vm378, %v368, 0
      %v416 = vsel %vm378, %v369, 0
      %v419 = vsel %vm378, %v370, 0
      %v422 = vsel %vm378, %v371, 0
      %v425 = vsel %vm378, %v372, 0
      %vm427 = vcmask 1045504
      %v429 = vsel %vm427, %v377, 0
      %431 = vmatprep.subr.bf16.mxu0 0
      %432 = vmatpush1.bf16.msra.mxu0 0
      %433 = vmatprep.subr.bf16.mxu0 0
      %434 = vmatpush1.bf16.msra.mxu0 0
      %435 = vmatprep.subr.bf16.mxu0 0
      %436 = vmatpush1.bf16.msra.mxu0 0
      %437 = vmatprep.subr.bf16.mxu0 0
      %438 = vmatpush1.bf16.msra.mxu0 0
      %439 = vmatprep.subr.bf16.mxu0 0
      %440 = vmatpush1.bf16.msra.mxu0 0
      %441 = vmatprep.subr.bf16.mxu0 0
      %442 = vmatpush1.bf16.msra.mxu0 0
      %443 = vmatprep.subr.bf16.mxu0 0
      %444 = vmatpush1.bf16.msra.mxu0 0
      %445 = vmatprep.subr.bf16.mxu0 0
      %446 = vmatpush1.bf16.msra.mxu0 %v429
      %447 = vmatprep.subr.bf16.mxu0 0
      %448 = vmatpush2.bf16.msra.mxu0 0
      %449 = vmatprep.subr.bf16.mxu0 0
      %450 = vmatpush2.bf16.msra.mxu0 0
      %451 = vmatprep.subr.bf16.mxu0 0
      %452 = vmatpush2.bf16.msra.mxu0 0
      %453 = vmatprep.subr.bf16.mxu0 0
      %454 = vmatpush2.bf16.msra.mxu0 0
      %455 = vmatprep.subr.bf16.mxu0 0
      %456 = vmatpush2.bf16.msra.mxu0 0
      %457 = vmatprep.subr.bf16.mxu0 0
      %458 = vmatpush2.bf16.msra.mxu0 0
      %459 = vmatprep.subr.bf16.mxu0 0
      %460 = vmatpush2.bf16.msra.mxu0 0
      %461 = vmatprep.subr.bf16.mxu0 0
      %462 = vmatpush2.bf16.msra.mxu0 0
      %463 = vmatprep.mubr.bf16.mxu0 0
      %464 = vmatmul.mubr.bf16.gmra.mxu0 %v380
      %v465 = vpop.f32.mrf.mxu0
      %v466 = vadd.f32 0.0, %v465
      %v467 = vpop.f32.mrf.mxu0
      %v468 = vpop.f32.mrf.mxu0
      %v469 = vadd.f32 0.0, %v468
      %v470 = vpop.f32.mrf.mxu0
      %471 = vmatprep.mubr.bf16.mxu0 0
      %472 = vmatmul.mubr.bf16.gmra.mxu0 %v383
      %v473 = vpop.f32.mrf.mxu0
      %v474 = vadd.f32 0.0, %v473
      %v475 = vpop.f32.mrf.mxu0
      %v476 = vpop.f32.mrf.mxu0
      %v477 = vadd.f32 0.0, %v476
      %v478 = vpop.f32.mrf.mxu0
      %479 = vmatprep.mubr.bf16.mxu0 0
      %480 = vmatmul.mubr.bf16.gmra.mxu0 %v386
      %v481 = vpop.f32.mrf.mxu0
      %v482 = vadd.f32 0.0, %v481
      %v483 = vpop.f32.mrf.mxu0
      %v484 = vpop.f32.mrf.mxu0
      %v485 = vadd.f32 0.0, %v484
      %v486 = vpop.f32.mrf.mxu0
      %487 = vmatprep.mubr.bf16.mxu0 0
      %488 = vmatmul.mubr.bf16.gmra.mxu0 %v389
      %v489 = vpop.f32.mrf.mxu0
      %v490 = vadd.f32 0.0, %v489
      %v491 = vpop.f32.mrf.mxu0
      %v492 = vpop.f32.mrf.mxu0
      %v493 = vadd.f32 0.0, %v492
      %v494 = vpop.f32.mrf.mxu0
      %495 = vmatprep.mubr.bf16.mxu0 0
      %496 = vmatmul.mubr.bf16.gmra.mxu0 %v392
      %v497 = vpop.f32.mrf.mxu0
      %v498 = vadd.f32 0.0, %v497
      %v499 = vpop.f32.mrf.mxu0
      %v500 = vpop.f32.mrf.mxu0
      %v501 = vadd.f32 0.0, %v500
      %v502 = vpop.f32.mrf.mxu0
      %503 = vmatprep.mubr.bf16.mxu0 0
      %504 = vmatmul.mubr.bf16.gmra.mxu0 %v395
      %v505 = vpop.f32.mrf.mxu0
      %v506 = vadd.f32 0.0, %v505
      %v507 = vpop.f32.mrf.mxu0
      %v508 = vpop.f32.mrf.mxu0
      %v509 = vadd.f32 0.0, %v508
      %v510 = vpop.f32.mrf.mxu0
      %511 = vmatprep.mubr.bf16.mxu0 0
      %512 = vmatmul.mubr.bf16.gmra.mxu0 %v398
      %v513 = vpop.f32.mrf.mxu0
      %v514 = vadd.f32 0.0, %v513
      %v515 = vpop.f32.mrf.mxu0
      %v516 = vpop.f32.mrf.mxu0
      %v517 = vadd.f32 0.0, %v516
      %v518 = vpop.f32.mrf.mxu0
      %519 = vmatprep.mubr.bf16.mxu0 0
      %520 = vmatmul.mubr.bf16.gmra.mxu0 %v401
      %v521 = vpop.f32.mrf.mxu0
      %v522 = vadd.f32 0.0, %v521
      %v523 = vpop.f32.mrf.mxu0
      %v524 = vpop.f32.mrf.mxu0
      %v525 = vadd.f32 0.0, %v524
      %v526 = vpop.f32.mrf.mxu0
      %527 = vmatprep.mubr.bf16.mxu0 0
      %528 = vmatmul.mubr.bf16.gmra.mxu0 %v404
      %v529 = vpop.f32.mrf.mxu0
      %v530 = vadd.f32 0.0, %v529
      %v531 = vpop.f32.mrf.mxu0
      %v532 = vpop.f32.mrf.mxu0
      %v533 = vadd.f32 0.0, %v532
      %v534 = vpop.f32.mrf.mxu0
      %535 = vmatprep.mubr.bf16.mxu0 0
      %536 = vmatmul.mubr.bf16.gmra.mxu0 %v407
      %v537 = vpop.f32.mrf.mxu0
      %v538 = vadd.f32 0.0, %v537
      %v539 = vpop.f32.mrf.mxu0
      %v540 = vpop.f32.mrf.mxu0
      %v541 = vadd.f32 0.0, %v540
      %v542 = vpop.f32.mrf.mxu0
      %543 = vmatprep.mubr.bf16.mxu0 0
      %544 = vmatmul.mubr.bf16.gmra.mxu0 %v410
      %v545 = vpop.f32.mrf.mxu0
      %v546 = vadd.f32 0.0, %v545
      %v547 = vpop.f32.mrf.mxu0
      %v548 = vpop.f32.mrf.mxu0
      %v549 = vadd.f32 0.0, %v548
      %v550 = vpop.f32.mrf.mxu0
      %551 = vmatprep.mubr.bf16.mxu0 0
      %552 = vmatmul.mubr.bf16.gmra.mxu0 %v413
      %v553 = vpop.f32.mrf.mxu0
      %v554 = vadd.f32 0.0, %v553
      %v555 = vpop.f32.mrf.mxu0
      %v556 = vpop.f32.mrf.mxu0
      %v557 = vadd.f32 0.0, %v556
      %v558 = vpop.f32.mrf.mxu0
      %559 = vmatprep.mubr.bf16.mxu0 0
      %560 = vmatmul.mubr.bf16.gmra.mxu0 %v416
      %v561 = vpop.f32.mrf.mxu0
      %v562 = vadd.f32 0.0, %v561
      %v563 = vpop.f32.mrf.mxu0
      %v564 = vpop.f32.mrf.mxu0
      %v565 = vadd.f32 0.0, %v564
      %v566 = vpop.f32.mrf.mxu0
      %567 = vmatprep.mubr.bf16.mxu0 0
      %568 = vmatmul.mubr.bf16.gmra.mxu0 %v419
      %v569 = vpop.f32.mrf.mxu0
      %v570 = vadd.f32 0.0, %v569
      %v571 = vpop.f32.mrf.mxu0
      %v572 = vpop.f32.mrf.mxu0
      %v573 = vadd.f32 0.0, %v572
      %v574 = vpop.f32.mrf.mxu0
      %575 = vmatprep.mubr.bf16.mxu0 0
      %576 = vmatmul.mubr.bf16.gmra.mxu0 %v422
      %v577 = vpop.f32.mrf.mxu0
      %v578 = vadd.f32 0.0, %v577
      %v579 = vpop.f32.mrf.mxu0
      %v580 = vpop.f32.mrf.mxu0
      %v581 = vadd.f32 0.0, %v580
      %v582 = vpop.f32.mrf.mxu0
      %583 = vmatprep.mubr.bf16.mxu0 0
      %584 = vmatmul.mubr.bf16.gmra.mxu0 %v425
      %v585 = vpop.f32.mrf.mxu0
      %v586 = vadd.f32 0.0, %v585
      %v587 = vpop.f32.mrf.mxu0
      %v588 = vpop.f32.mrf.mxu0
      %v589 = vadd.f32 0.0, %v588
      %v590 = vpop.f32.mrf.mxu0
      %591 = vdwg.mxu0
      %592 = vst [vmem:[%s240] sm:$0xff] %v466
      %593 = vst [vmem:[%s240 + $0x8] sm:$0xff] %v469
      %594 = vst [vmem:[%s240 + $0x10] sm:$0xff] %v474
      %595 = vst [vmem:[%s240 + $0x18] sm:$0xff] %v477
      %596 = vst [vmem:[%s240 + $0x20] sm:$0xff] %v482
      %597 = vst [vmem:[%s240 + $0x28] sm:$0xff] %v485
      %598 = vst [vmem:[%s240 + $0x30] sm:$0xff] %v490
      %599 = vst [vmem:[%s240 + $0x38] sm:$0xff] %v493
      %600 = vst [vmem:[%s240 + $0x40] sm:$0xff] %v498
      %601 = vst [vmem:[%s240 + $0x48] sm:$0xff] %v501
      %602 = vst [vmem:[%s240 + $0x50] sm:$0xff] %v506
      %603 = vst [vmem:[%s240 + $0x58] sm:$0xff] %v509
      %604 = vst [vmem:[%s240 + $0x60] sm:$0xff] %v514
      %605 = vst [vmem:[%s240 + $0x68] sm:$0xff] %v517
      %606 = vst [vmem:[%s240 + $0x70] sm:$0xff] %v522
      %607 = vst [vmem:[%s240 + $0x78] sm:$0xff] %v525
      %608 = vst [vmem:[%s240 + $0x80] sm:$0xff] %v530
      %609 = vst [vmem:[%s240 + $0x88] sm:$0xff] %v533
      %610 = vst [vmem:[%s240 + $0x90] sm:$0xff] %v538
      %611 = vst [vmem:[%s240 + $0x98] sm:$0xff] %v541
      %612 = vst [vmem:[%s240 + $0xa0] sm:$0xff] %v546
      %613 = vst [vmem:[%s240 + $0xa8] sm:$0xff] %v549
      %614 = vst [vmem:[%s240 + $0xb0] sm:$0xff] %v554
      %615 = vst [vmem:[%s240 + $0xb8] sm:$0xff] %v557
      %616 = vst [vmem:[%s240 + $0xc0] sm:$0xff] %v562
      %617 = vst [vmem:[%s240 + $0xc8] sm:$0xff] %v565
      %618 = vst [vmem:[%s240 + $0xd0] sm:$0xff] %v570
      %619 = vst [vmem:[%s240 + $0xd8] sm:$0xff] %v573
      %620 = vst [vmem:[%s240 + $0xe0] sm:$0xff] %v578
      %621 = vst [vmem:[%s240 + $0xe8] sm:$0xff] %v581
      %622 = vst [vmem:[%s240 + $0xf0] sm:$0xff] %v586
      %623 = vst [vmem:[%s240 + $0xf8] sm:$0xff] %v589
      %s624 = sadd.s32 %s255, 1
      %s625 = smul.u32 %s624, 2
      %s626 = smul.addr %s625, 4
      %s627 = scalar_lea.vmem %s231, %s626
      %v628 = vld [vmem:[%s627] sm:$0xf]
      %v629 = vld [vmem:[%s627 + $0x4] sm:$0xf]
      %v630 = vld [vmem:[%s627 + $0x8] sm:$0xf]
      %v631 = vld [vmem:[%s627 + $0xc] sm:$0xf]
      %v632 = vld [vmem:[%s627 + $0x10] sm:$0xf]
      %v633 = vld [vmem:[%s627 + $0x14] sm:$0xf]
      %v634 = vld [vmem:[%s627 + $0x18] sm:$0xf]
      %v635 = vld [vmem:[%s627 + $0x1c] sm:$0xf]
      %v636 = vld [vmem:[%s627 + $0x20] sm:$0xf]
      %v637 = vld [vmem:[%s627 + $0x24] sm:$0xf]
      %v638 = vld [vmem:[%s627 + $0x28] sm:$0xf]
      %v639 = vld [vmem:[%s627 + $0x2c] sm:$0xf]
      %v640 = vld [vmem:[%s627 + $0x30] sm:$0xf]
      %v641 = vld [vmem:[%s627 + $0x34] sm:$0xf]
      %v642 = vld [vmem:[%s627 + $0x38] sm:$0xf]
      %v643 = vld [vmem:[%s627 + $0x3c] sm:$0xf]
      %v644 = vld [vmem:[%s627 + $0x40] sm:$0xf]
      %v645 = vld [vmem:[%s627 + $0x44] sm:$0xf]
      %v646 = vld [vmem:[%s627 + $0x48] sm:$0xf]
      %v647 = vld [vmem:[%s627 + $0x4c] sm:$0xf]
      %v648 = vld [vmem:[%s627 + $0x50] sm:$0xf]
      %v649 = vld [vmem:[%s627 + $0x54] sm:$0xf]
      %v650 = vld [vmem:[%s627 + $0x58] sm:$0xf]
      %v651 = vld [vmem:[%s627 + $0x5c] sm:$0xf]
      %v652 = vld [vmem:[%s627 + $0x60] sm:$0xf]
      %v653 = vld [vmem:[%s627 + $0x64] sm:$0xf]
      %v654 = vld [vmem:[%s627 + $0x68] sm:$0xf]
      %v655 = vld [vmem:[%s627 + $0x6c] sm:$0xf]
      %v656 = vld [vmem:[%s627 + $0x70] sm:$0xf]
      %v657 = vld [vmem:[%s627 + $0x74] sm:$0xf]
      %v658 = vld [vmem:[%s627 + $0x78] sm:$0xf]
      %v659 = vld [vmem:[%s627 + $0x7c] sm:$0xf]
      %s660 = scalar_lea.vmem %s1, 8
      %v661 = vld [vmem:[%s660] sm:$0xf]
      %v662 = vld [vmem:[%s660 + $0x4] sm:$0x3]
      %v695 = vunpack.c.l.b16 %v628
      %v696 = vunpack.c.l.b16 %v629
      %v697 = vunpack.c.l.b16 %v630
      %v698 = vunpack.c.l.b16 %v631
      %v699 = vunpack.c.l.b16 %v632
      %v700 = vunpack.c.l.b16 %v633
      %v701 = vunpack.c.l.b16 %v634
      %v702 = vunpack.c.l.b16 %v635
      %v703 = vunpack.c.l.b16 %v636
      %v704 = vunpack.c.l.b16 %v637
      %v705 = vunpack.c.l.b16 %v638
      %v706 = vunpack.c.l.b16 %v639
      %v707 = vunpack.c.l.b16 %v640
      %v708 = vunpack.c.l.b16 %v641
      %v709 = vunpack.c.l.b16 %v642
      %v710 = vunpack.c.l.b16 %v643
      %v711 = vunpack.c.l.b16 %v644
      %v712 = vunpack.c.l.b16 %v645
      %v713 = vunpack.c.l.b16 %v646
      %v714 = vunpack.c.l.b16 %v647
      %v715 = vunpack.c.l.b16 %v648
      %v716 = vunpack.c.l.b16 %v649
      %v717 = vunpack.c.l.b16 %v650
      %v718 = vunpack.c.l.b16 %v651
      %v719 = vunpack.c.l.b16 %v652
      %v720 = vunpack.c.l.b16 %v653
      %v721 = vunpack.c.l.b16 %v654
      %v722 = vunpack.c.l.b16 %v655
      %v723 = vunpack.c.l.b16 %v656
      %v724 = vunpack.c.l.b16 %v657
      %v725 = vunpack.c.l.b16 %v658
      %v726 = vunpack.c.l.b16 %v659
      %v727 = vpack.c.b16 %v696, %v695
      %v728 = vpack.c.b16 %v698, %v697
      %v729 = vpack.c.b16 %v700, %v699
      %v730 = vpack.c.b16 %v702, %v701
      %v731 = vpack.c.b16 %v704, %v703
      %v732 = vpack.c.b16 %v706, %v705
      %v733 = vpack.c.b16 %v708, %v707
      %v734 = vpack.c.b16 %v710, %v709
      %v735 = vpack.c.b16 %v712, %v711
      %v736 = vpack.c.b16 %v714, %v713
      %v737 = vpack.c.b16 %v716, %v715
      %v738 = vpack.c.b16 %v718, %v717
      %v739 = vpack.c.b16 %v720, %v719
      %v740 = vpack.c.b16 %v722, %v721
      %v741 = vpack.c.b16 %v724, %v723
      %v742 = vpack.c.b16 %v726, %v725
      %v745 = vunpack.c.l.b16 %v661
      %v746 = vunpack.c.l.b16 %v662
      %v747 = vpack.c.b16 %v746, %v745
      %v749 = vsel %vm378, %v727, 0
      %v752 = vsel %vm378, %v728, 0
      %v755 = vsel %vm378, %v729, 0
      %v758 = vsel %vm378, %v730, 0
      %v761 = vsel %vm378, %v731, 0
      %v764 = vsel %vm378, %v732, 0
      %v767 = vsel %vm378, %v733, 0
      %v770 = vsel %vm378, %v734, 0
      %v773 = vsel %vm378, %v735, 0
      %v776 = vsel %vm378, %v736, 0
      %v779 = vsel %vm378, %v737, 0
      %v782 = vsel %vm378, %v738, 0
      %v785 = vsel %vm378, %v739, 0
      %v788 = vsel %vm378, %v740, 0
      %v791 = vsel %vm378, %v741, 0
      %v794 = vsel %vm378, %v742, 0
      %v797 = vsel %vm427, %v747, 0
      %799 = vmatprep.subr.bf16.mxu0 0
      %800 = vmatpush1.bf16.msra.mxu0 0
      %801 = vmatprep.subr.bf16.mxu0 0
      %802 = vmatpush1.bf16.msra.mxu0 0
      %803 = vmatprep.subr.bf16.mxu0 0
      %804 = vmatpush1.bf16.msra.mxu0 0
      %805 = vmatprep.subr.bf16.mxu0 0
      %806 = vmatpush1.bf16.msra.mxu0 0
      %807 = vmatprep.subr.bf16.mxu0 0
      %808 = vmatpush1.bf16.msra.mxu0 0
      %809 = vmatprep.subr.bf16.mxu0 0
      %810 = vmatpush1.bf16.msra.mxu0 0
      %811 = vmatprep.subr.bf16.mxu0 0
      %812 = vmatpush1.bf16.msra.mxu0 0
      %813 = vmatprep.subr.bf16.mxu0 0
      %814 = vmatpush1.bf16.msra.mxu0 %v797
      %815 = vmatprep.subr.bf16.mxu0 0
      %816 = vmatpush2.bf16.msra.mxu0 0
      %817 = vmatprep.subr.bf16.mxu0 0
      %818 = vmatpush2.bf16.msra.mxu0 0
      %819 = vmatprep.subr.bf16.mxu0 0
      %820 = vmatpush2.bf16.msra.mxu0 0
      %821 = vmatprep.subr.bf16.mxu0 0
      %822 = vmatpush2.bf16.msra.mxu0 0
      %823 = vmatprep.subr.bf16.mxu0 0
      %824 = vmatpush2.bf16.msra.mxu0 0
      %825 = vmatprep.subr.bf16.mxu0 0
      %826 = vmatpush2.bf16.msra.mxu0 0
      %827 = vmatprep.subr.bf16.mxu0 0
      %828 = vmatpush2.bf16.msra.mxu0 0
      %829 = vmatprep.subr.bf16.mxu0 0
      %830 = vmatpush2.bf16.msra.mxu0 0
      %831 = vmatprep.mubr.bf16.mxu0 0
      %832 = vmatmul.mubr.bf16.gmra.mxu0 %v749
      %v833 = vpop.f32.mrf.mxu0
      %v834 = vadd.f32 0.0, %v833
      %v835 = vpop.f32.mrf.mxu0
      %v836 = vpop.f32.mrf.mxu0
      %v837 = vadd.f32 0.0, %v836
      %v838 = vpop.f32.mrf.mxu0
      %839 = vmatprep.mubr.bf16.mxu0 0
      %840 = vmatmul.mubr.bf16.gmra.mxu0 %v752
      %v841 = vpop.f32.mrf.mxu0
      %v842 = vadd.f32 0.0, %v841
      %v843 = vpop.f32.mrf.mxu0
      %v844 = vpop.f32.mrf.mxu0
      %v845 = vadd.f32 0.0, %v844
      %v846 = vpop.f32.mrf.mxu0
      %847 = vmatprep.mubr.bf16.mxu0 0
      %848 = vmatmul.mubr.bf16.gmra.mxu0 %v755
      %v849 = vpop.f32.mrf.mxu0
      %v850 = vadd.f32 0.0, %v849
      %v851 = vpop.f32.mrf.mxu0
      %v852 = vpop.f32.mrf.mxu0
      %v853 = vadd.f32 0.0, %v852
      %v854 = vpop.f32.mrf.mxu0
      %855 = vmatprep.mubr.bf16.mxu0 0
      %856 = vmatmul.mubr.bf16.gmra.mxu0 %v758
      %v857 = vpop.f32.mrf.mxu0
      %v858 = vadd.f32 0.0, %v857
      %v859 = vpop.f32.mrf.mxu0
      %v860 = vpop.f32.mrf.mxu0
      %v861 = vadd.f32 0.0, %v860
      %v862 = vpop.f32.mrf.mxu0
      %863 = vmatprep.mubr.bf16.mxu0 0
      %864 = vmatmul.mubr.bf16.gmra.mxu0 %v761
      %v865 = vpop.f32.mrf.mxu0
      %v866 = vadd.f32 0.0, %v865
      %v867 = vpop.f32.mrf.mxu0
      %v868 = vpop.f32.mrf.mxu0
      %v869 = vadd.f32 0.0, %v868
      %v870 = vpop.f32.mrf.mxu0
      %871 = vmatprep.mubr.bf16.mxu0 0
      %872 = vmatmul.mubr.bf16.gmra.mxu0 %v764
      %v873 = vpop.f32.mrf.mxu0
      %v874 = vadd.f32 0.0, %v873
      %v875 = vpop.f32.mrf.mxu0
      %v876 = vpop.f32.mrf.mxu0
      %v877 = vadd.f32 0.0, %v876
      %v878 = vpop.f32.mrf.mxu0
      %879 = vmatprep.mubr.bf16.mxu0 0
      %880 = vmatmul.mubr.bf16.gmra.mxu0 %v767
      %v881 = vpop.f32.mrf.mxu0
      %v882 = vadd.f32 0.0, %v881
      %v883 = vpop.f32.mrf.mxu0
      %v884 = vpop.f32.mrf.mxu0
      %v885 = vadd.f32 0.0, %v884
      %v886 = vpop.f32.mrf.mxu0
      %887 = vmatprep.mubr.bf16.mxu0 0
      %888 = vmatmul.mubr.bf16.gmra.mxu0 %v770
      %v889 = vpop.f32.mrf.mxu0
      %v890 = vadd.f32 0.0, %v889
      %v891 = vpop.f32.mrf.mxu0
      %v892 = vpop.f32.mrf.mxu0
      %v893 = vadd.f32 0.0, %v892
      %v894 = vpop.f32.mrf.mxu0
      %895 = vmatprep.mubr.bf16.mxu0 0
      %896 = vmatmul.mubr.bf16.gmra.mxu0 %v773
      %v897 = vpop.f32.mrf.mxu0
      %v898 = vadd.f32 0.0, %v897
      %v899 = vpop.f32.mrf.mxu0
      %v900 = vpop.f32.mrf.mxu0
      %v901 = vadd.f32 0.0, %v900
      %v902 = vpop.f32.mrf.mxu0
      %903 = vmatprep.mubr.bf16.mxu0 0
      %904 = vmatmul.mubr.bf16.gmra.mxu0 %v776
      %v905 = vpop.f32.mrf.mxu0
      %v906 = vadd.f32 0.0, %v905
      %v907 = vpop.f32.mrf.mxu0
      %v908 = vpop.f32.mrf.mxu0
      %v909 = vadd.f32 0.0, %v908
      %v910 = vpop.f32.mrf.mxu0
      %911 = vmatprep.mubr.bf16.mxu0 0
      %912 = vmatmul.mubr.bf16.gmra.mxu0 %v779
      %v913 = vpop.f32.mrf.mxu0
      %v914 = vadd.f32 0.0, %v913
      %v915 = vpop.f32.mrf.mxu0
      %v916 = vpop.f32.mrf.mxu0
      %v917 = vadd.f32 0.0, %v916
      %v918 = vpop.f32.mrf.mxu0
      %919 = vmatprep.mubr.bf16.mxu0 0
      %920 = vmatmul.mubr.bf16.gmra.mxu0 %v782
      %v921 = vpop.f32.mrf.mxu0
      %v922 = vadd.f32 0.0, %v921
      %v923 = vpop.f32.mrf.mxu0
      %v924 = vpop.f32.mrf.mxu0
      %v925 = vadd.f32 0.0, %v924
      %v926 = vpop.f32.mrf.mxu0
      %927 = vmatprep.mubr.bf16.mxu0 0
      %928 = vmatmul.mubr.bf16.gmra.mxu0 %v785
      %v929 = vpop.f32.mrf.mxu0
      %v930 = vadd.f32 0.0, %v929
      %v931 = vpop.f32.mrf.mxu0
      %v932 = vpop.f32.mrf.mxu0
      %v933 = vadd.f32 0.0, %v932
      %v934 = vpop.f32.mrf.mxu0
      %935 = vmatprep.mubr.bf16.mxu0 0
      %936 = vmatmul.mubr.bf16.gmra.mxu0 %v788
      %v937 = vpop.f32.mrf.mxu0
      %v938 = vadd.f32 0.0, %v937
      %v939 = vpop.f32.mrf.mxu0
      %v940 = vpop.f32.mrf.mxu0
      %v941 = vadd.f32 0.0, %v940
      %v942 = vpop.f32.mrf.mxu0
      %943 = vmatprep.mubr.bf16.mxu0 0
      %944 = vmatmul.mubr.bf16.gmra.mxu0 %v791
      %v945 = vpop.f32.mrf.mxu0
      %v946 = vadd.f32 0.0, %v945
      %v947 = vpop.f32.mrf.mxu0
      %v948 = vpop.f32.mrf.mxu0
      %v949 = vadd.f32 0.0, %v948
      %v950 = vpop.f32.mrf.mxu0
      %951 = vmatprep.mubr.bf16.mxu0 0
      %952 = vmatmul.mubr.bf16.gmra.mxu0 %v794
      %v953 = vpop.f32.mrf.mxu0
      %v954 = vadd.f32 0.0, %v953
      %v955 = vpop.f32.mrf.mxu0
      %v956 = vpop.f32.mrf.mxu0
      %v957 = vadd.f32 0.0, %v956
      %v958 = vpop.f32.mrf.mxu0
      %959 = vdwg.mxu0
      %v960 = vld [vmem:[%s240] sm:$0xff]
      %v961 = vld [vmem:[%s240 + $0x8] sm:$0xff]
      %v962 = vld [vmem:[%s240 + $0x10] sm:$0xff]
      %v963 = vld [vmem:[%s240 + $0x18] sm:$0xff]
      %v964 = vld [vmem:[%s240 + $0x20] sm:$0xff]
      %v965 = vld [vmem:[%s240 + $0x28] sm:$0xff]
      %v966 = vld [vmem:[%s240 + $0x30] sm:$0xff]
      %v967 = vld [vmem:[%s240 + $0x38] sm:$0xff]
      %v968 = vld [vmem:[%s240 + $0x40] sm:$0xff]
      %v969 = vld [vmem:[%s240 + $0x48] sm:$0xff]
      %v970 = vld [vmem:[%s240 + $0x50] sm:$0xff]
      %v971 = vld [vmem:[%s240 + $0x58] sm:$0xff]
      %v972 = vld [vmem:[%s240 + $0x60] sm:$0xff]
      %v973 = vld [vmem:[%s240 + $0x68] sm:$0xff]
      %v974 = vld [vmem:[%s240 + $0x70] sm:$0xff]
      %v975 = vld [vmem:[%s240 + $0x78] sm:$0xff]
      %v976 = vld [vmem:[%s240 + $0x80] sm:$0xff]
      %v977 = vld [vmem:[%s240 + $0x88] sm:$0xff]
      %v978 = vld [vmem:[%s240 + $0x90] sm:$0xff]
      %v979 = vld [vmem:[%s240 + $0x98] sm:$0xff]
      %v980 = vld [vmem:[%s240 + $0xa0] sm:$0xff]
      %v981 = vld [vmem:[%s240 + $0xa8] sm:$0xff]
      %v982 = vld [vmem:[%s240 + $0xb0] sm:$0xff]
      %v983 = vld [vmem:[%s240 + $0xb8] sm:$0xff]
      %v984 = vld [vmem:[%s240 + $0xc0] sm:$0xff]
      %v985 = vld [vmem:[%s240 + $0xc8] sm:$0xff]
      %v986 = vld [vmem:[%s240 + $0xd0] sm:$0xff]
      %v987 = vld [vmem:[%s240 + $0xd8] sm:$0xff]
      %v988 = vld [vmem:[%s240 + $0xe0] sm:$0xff]
      %v989 = vld [vmem:[%s240 + $0xe8] sm:$0xff]
      %v990 = vld [vmem:[%s240 + $0xf0] sm:$0xff]
      %v991 = vld [vmem:[%s240 + $0xf8] sm:$0xff]
      %v992 = vadd.f32 %v960, %v834
      %v993 = vadd.f32 %v961, %v837
      %v994 = vadd.f32 %v962, %v842
      %v995 = vadd.f32 %v963, %v845
      %v996 = vadd.f32 %v964, %v850
      %v997 = vadd.f32 %v965, %v853
      %v998 = vadd.f32 %v966, %v858
      %v999 = vadd.f32 %v967, %v861
      %v1000 = vadd.f32 %v968, %v866
      %v1001 = vadd.f32 %v969, %v869
      %v1002 = vadd.f32 %v970, %v874
      %v1003 = vadd.f32 %v971, %v877
      %v1004 = vadd.f32 %v972, %v882
      %v1005 = vadd.f32 %v973, %v885
      %v1006 = vadd.f32 %v974, %v890
      %v1007 = vadd.f32 %v975, %v893
      %v1008 = vadd.f32 %v976, %v898
      %v1009 = vadd.f32 %v977, %v901
      %v1010 = vadd.f32 %v978, %v906
      %v1011 = vadd.f32 %v979, %v909
      %v1012 = vadd.f32 %v980, %v914
      %v1013 = vadd.f32 %v981, %v917
      %v1014 = vadd.f32 %v982, %v922
      %v1015 = vadd.f32 %v983, %v925
      %v1016 = vadd.f32 %v984, %v930
      %v1017 = vadd.f32 %v985, %v933
      %v1018 = vadd.f32 %v986, %v938
      %v1019 = vadd.f32 %v987, %v941
      %v1020 = vadd.f32 %v988, %v946
      %v1021 = vadd.f32 %v989, %v949
      %v1022 = vadd.f32 %v990, %v954
      %v1023 = vadd.f32 %v991, %v957
      %1024 = vst [vmem:[%s240] sm:$0xff] %v992
      %1025 = vst [vmem:[%s240 + $0x8] sm:$0xff] %v993
      %1026 = vst [vmem:[%s240 + $0x10] sm:$0xff] %v994
      %1027 = vst [vmem:[%s240 + $0x18] sm:$0xff] %v995
      %1028 = vst [vmem:[%s240 + $0x20] sm:$0xff] %v996
      %1029 = vst [vmem:[%s240 + $0x28] sm:$0xff] %v997
      %1030 = vst [vmem:[%s240 + $0x30] sm:$0xff] %v998
      %1031 = vst [vmem:[%s240 + $0x38] sm:$0xff] %v999
      %1032 = vst [vmem:[%s240 + $0x40] sm:$0xff] %v1000
      %1033 = vst [vmem:[%s240 + $0x48] sm:$0xff] %v1001
      %1034 = vst [vmem:[%s240 + $0x50] sm:$0xff] %v1002
      %1035 = vst [vmem:[%s240 + $0x58] sm:$0xff] %v1003
      %1036 = vst [vmem:[%s240 + $0x60] sm:$0xff] %v1004
      %1037 = vst [vmem:[%s240 + $0x68] sm:$0xff] %v1005
      %1038 = vst [vmem:[%s240 + $0x70] sm:$0xff] %v1006
      %1039 = vst [vmem:[%s240 + $0x78] sm:$0xff] %v1007
      %1040 = vst [vmem:[%s240 + $0x80] sm:$0xff] %v1008
      %1041 = vst [vmem:[%s240 + $0x88] sm:$0xff] %v1009
      %1042 = vst [vmem:[%s240 + $0x90] sm:$0xff] %v1010
      %1043 = vst [vmem:[%s240 + $0x98] sm:$0xff] %v1011
      %1044 = vst [vmem:[%s240 + $0xa0] sm:$0xff] %v1012
      %1045 = vst [vmem:[%s240 + $0xa8] sm:$0xff] %v1013
      %1046 = vst [vmem:[%s240 + $0xb0] sm:$0xff] %v1014
      %1047 = vst [vmem:[%s240 + $0xb8] sm:$0xff] %v1015
      %1048 = vst [vmem:[%s240 + $0xc0] sm:$0xff] %v1016
      %1049 = vst [vmem:[%s240 + $0xc8] sm:$0xff] %v1017
      %1050 = vst [vmem:[%s240 + $0xd0] sm:$0xff] %v1018
      %1051 = vst [vmem:[%s240 + $0xd8] sm:$0xff] %v1019
      %1052 = vst [vmem:[%s240 + $0xe0] sm:$0xff] %v1020
      %1053 = vst [vmem:[%s240 + $0xe8] sm:$0xff] %v1021
      %1054 = vst [vmem:[%s240 + $0xf0] sm:$0xff] %v1022
      %1055 = vst [vmem:[%s240 + $0xf8] sm:$0xff] %v1023
      %s1056 = sadd.s32 %s255, 2
      %s1057 = smul.u32 %s1056, 2
      %s1058 = smul.addr %s1057, 4
      %s1059 = scalar_lea.vmem %s231, %s1058
      %v1060 = vld [vmem:[%s1059] sm:$0xf]
      %v1061 = vld [vmem:[%s1059 + $0x4] sm:$0xf]
      %v1062 = vld [vmem:[%s1059 + $0x8] sm:$0xf]
      %v1063 = vld [vmem:[%s1059 + $0xc] sm:$0xf]
      %v1064 = vld [vmem:[%s1059 + $0x10] sm:$0xf]
      %v1065 = vld [vmem:[%s1059 + $0x14] sm:$0xf]
      %v1066 = vld [vmem:[%s1059 + $0x18] sm:$0xf]
      %v1067 = vld [vmem:[%s1059 + $0x1c] sm:$0xf]
      %v1068 = vld [vmem:[%s1059 + $0x20] sm:$0xf]
      %v1069 = vld [vmem:[%s1059 + $0x24] sm:$0xf]
      %v1070 = vld [vmem:[%s1059 + $0x28] sm:$0xf]
      %v1071 = vld [vmem:[%s1059 + $0x2c] sm:$0xf]
      %v1072 = vld [vmem:[%s1059 + $0x30] sm:$0xf]
      %v1073 = vld [vmem:[%s1059 + $0x34] sm:$0xf]
      %v1074 = vld [vmem:[%s1059 + $0x38] sm:$0xf]
      %v1075 = vld [vmem:[%s1059 + $0x3c] sm:$0xf]
      %v1076 = vld [vmem:[%s1059 + $0x40] sm:$0xf]
      %v1077 = vld [vmem:[%s1059 + $0x44] sm:$0xf]
      %v1078 = vld [vmem:[%s1059 + $0x48] sm:$0xf]
      %v1079 = vld [vmem:[%s1059 + $0x4c] sm:$0xf]
      %v1080 = vld [vmem:[%s1059 + $0x50] sm:$0xf]
      %v1081 = vld [vmem:[%s1059 + $0x54] sm:$0xf]
      %v1082 = vld [vmem:[%s1059 + $0x58] sm:$0xf]
      %v1083 = vld [vmem:[%s1059 + $0x5c] sm:$0xf]
      %v1084 = vld [vmem:[%s1059 + $0x60] sm:$0xf]
      %v1085 = vld [vmem:[%s1059 + $0x64] sm:$0xf]
      %v1086 = vld [vmem:[%s1059 + $0x68] sm:$0xf]
      %v1087 = vld [vmem:[%s1059 + $0x6c] sm:$0xf]
      %v1088 = vld [vmem:[%s1059 + $0x70] sm:$0xf]
      %v1089 = vld [vmem:[%s1059 + $0x74] sm:$0xf]
      %v1090 = vld [vmem:[%s1059 + $0x78] sm:$0xf]
      %v1091 = vld [vmem:[%s1059 + $0x7c] sm:$0xf]
      %s1092 = scalar_lea.vmem %s1, 16
      %v1093 = vld [vmem:[%s1092] sm:$0xf]
      %v1094 = vld [vmem:[%s1092 + $0x4] sm:$0x3]
      %v1127 = vunpack.c.l.b16 %v1060
      %v1128 = vunpack.c.l.b16 %v1061
      %v1129 = vunpack.c.l.b16 %v1062
      %v1130 = vunpack.c.l.b16 %v1063
      %v1131 = vunpack.c.l.b16 %v1064
      %v1132 = vunpack.c.l.b16 %v1065
      %v1133 = vunpack.c.l.b16 %v1066
      %v1134 = vunpack.c.l.b16 %v1067
      %v1135 = vunpack.c.l.b16 %v1068
      %v1136 = vunpack.c.l.b16 %v1069
      %v1137 = vunpack.c.l.b16 %v1070
      %v1138 = vunpack.c.l.b16 %v1071
      %v1139 = vunpack.c.l.b16 %v1072
      %v1140 = vunpack.c.l.b16 %v1073
      %v1141 = vunpack.c.l.b16 %v1074
      %v1142 = vunpack.c.l.b16 %v1075
      %v1143 = vunpack.c.l.b16 %v1076
      %v1144 = vunpack.c.l.b16 %v1077
      %v1145 = vunpack.c.l.b16 %v1078
      %v1146 = vunpack.c.l.b16 %v1079
      %v1147 = vunpack.c.l.b16 %v1080
      %v1148 = vunpack.c.l.b16 %v1081
      %v1149 = vunpack.c.l.b16 %v1082
      %v1150 = vunpack.c.l.b16 %v1083
      %v1151 = vunpack.c.l.b16 %v1084
      %v1152 = vunpack.c.l.b16 %v1085
      %v1153 = vunpack.c.l.b16 %v1086
      %v1154 = vunpack.c.l.b16 %v1087
      %v1155 = vunpack.c.l.b16 %v1088
      %v1156 = vunpack.c.l.b16 %v1089
      %v1157 = vunpack.c.l.b16 %v1090
      %v1158 = vunpack.c.l.b16 %v1091
      %v1159 = vpack.c.b16 %v1128, %v1127
      %v1160 = vpack.c.b16 %v1130, %v1129
      %v1161 = vpack.c.b16 %v1132, %v1131
      %v1162 = vpack.c.b16 %v1134, %v1133
      %v1163 = vpack.c.b16 %v1136, %v1135
      %v1164 = vpack.c.b16 %v1138, %v1137
      %v1165 = vpack.c.b16 %v1140, %v1139
      %v1166 = vpack.c.b16 %v1142, %v1141
      %v1167 = vpack.c.b16 %v1144, %v1143
      %v1168 = vpack.c.b16 %v1146, %v1145
      %v1169 = vpack.c.b16 %v1148, %v1147
      %v1170 = vpack.c.b16 %v1150, %v1149
      %v1171 = vpack.c.b16 %v1152, %v1151
      %v1172 = vpack.c.b16 %v1154, %v1153
      %v1173 = vpack.c.b16 %v1156, %v1155
      %v1174 = vpack.c.b16 %v1158, %v1157
      %v1177 = vunpack.c.l.b16 %v1093
      %v1178 = vunpack.c.l.b16 %v1094
      %v1179 = vpack.c.b16 %v1178, %v1177
      %v1181 = vsel %vm378, %v1159, 0
      %v1184 = vsel %vm378, %v1160, 0
      %v1187 = vsel %vm378, %v1161, 0
      %v1190 = vsel %vm378, %v1162, 0
      %v1193 = vsel %vm378, %v1163, 0
      %v1196 = vsel %vm378, %v1164, 0
      %v1199 = vsel %vm378, %v1165, 0
      %v1202 = vsel %vm378, %v1166, 0
      %v1205 = vsel %vm378, %v1167, 0
      %v1208 = vsel %vm378, %v1168, 0
      %v1211 = vsel %vm378, %v1169, 0
      %v1214 = vsel %vm378, %v1170, 0
      %v1217 = vsel %vm378, %v1171, 0
      %v1220 = vsel %vm378, %v1172, 0
      %v1223 = vsel %vm378, %v1173, 0
      %v1226 = vsel %vm378, %v1174, 0
      %v1229 = vsel %vm427, %v1179, 0
      %1231 = vmatprep.subr.bf16.mxu0 0
      %1232 = vmatpush1.bf16.msra.mxu0 0
      %1233 = vmatprep.subr.bf16.mxu0 0
      %1234 = vmatpush1.bf16.msra.mxu0 0
      %1235 = vmatprep.subr.bf16.mxu0 0
      %1236 = vmatpush1.bf16.msra.mxu0 0
      %1237 = vmatprep.subr.bf16.mxu0 0
      %1238 = vmatpush1.bf16.msra.mxu0 0
      %1239 = vmatprep.subr.bf16.mxu0 0
      %1240 = vmatpush1.bf16.msra.mxu0 0
      %1241 = vmatprep.subr.bf16.mxu0 0
      %1242 = vmatpush1.bf16.msra.mxu0 0
      %1243 = vmatprep.subr.bf16.mxu0 0
      %1244 = vmatpush1.bf16.msra.mxu0 0
      %1245 = vmatprep.subr.bf16.mxu0 0
      %1246 = vmatpush1.bf16.msra.mxu0 %v1229
      %1247 = vmatprep.subr.bf16.mxu0 0
      %1248 = vmatpush2.bf16.msra.mxu0 0
      %1249 = vmatprep.subr.bf16.mxu0 0
      %1250 = vmatpush2.bf16.msra.mxu0 0
      %1251 = vmatprep.subr.bf16.mxu0 0
      %1252 = vmatpush2.bf16.msra.mxu0 0
      %1253 = vmatprep.subr.bf16.mxu0 0
      %1254 = vmatpush2.bf16.msra.mxu0 0
      %1255 = vmatprep.subr.bf16.mxu0 0
      %1256 = vmatpush2.bf16.msra.mxu0 0
      %1257 = vmatprep.subr.bf16.mxu0 0
      %1258 = vmatpush2.bf16.msra.mxu0 0
      %1259 = vmatprep.subr.bf16.mxu0 0
      %1260 = vmatpush2.bf16.msra.mxu0 0
      %1261 = vmatprep.subr.bf16.mxu0 0
      %1262 = vmatpush2.bf16.msra.mxu0 0
      %1263 = vmatprep.mubr.bf16.mxu0 0
      %1264 = vmatmul.mubr.bf16.gmra.mxu0 %v1181
      %v1265 = vpop.f32.mrf.mxu0
      %v1266 = vadd.f32 0.0, %v1265
      %v1267 = vpop.f32.mrf.mxu0
      %v1268 = vpop.f32.mrf.mxu0
      %v1269 = vadd.f32 0.0, %v1268
      %v1270 = vpop.f32.mrf.mxu0
      %1271 = vmatprep.mubr.bf16.mxu0 0
      %1272 = vmatmul.mubr.bf16.gmra.mxu0 %v1184
      %v1273 = vpop.f32.mrf.mxu0
      %v1274 = vadd.f32 0.0, %v1273
      %v1275 = vpop.f32.mrf.mxu0
      %v1276 = vpop.f32.mrf.mxu0
      %v1277 = vadd.f32 0.0, %v1276
      %v1278 = vpop.f32.mrf.mxu0
      %1279 = vmatprep.mubr.bf16.mxu0 0
      %1280 = vmatmul.mubr.bf16.gmra.mxu0 %v1187
      %v1281 = vpop.f32.mrf.mxu0
      %v1282 = vadd.f32 0.0, %v1281
      %v1283 = vpop.f32.mrf.mxu0
      %v1284 = vpop.f32.mrf.mxu0
      %v1285 = vadd.f32 0.0, %v1284
      %v1286 = vpop.f32.mrf.mxu0
      %1287 = vmatprep.mubr.bf16.mxu0 0
      %1288 = vmatmul.mubr.bf16.gmra.mxu0 %v1190
      %v1289 = vpop.f32.mrf.mxu0
      %v1290 = vadd.f32 0.0, %v1289
      %v1291 = vpop.f32.mrf.mxu0
      %v1292 = vpop.f32.mrf.mxu0
      %v1293 = vadd.f32 0.0, %v1292
      %v1294 = vpop.f32.mrf.mxu0
      %1295 = vmatprep.mubr.bf16.mxu0 0
      %1296 = vmatmul.mubr.bf16.gmra.mxu0 %v1193
      %v1297 = vpop.f32.mrf.mxu0
      %v1298 = vadd.f32 0.0, %v1297
      %v1299 = vpop.f32.mrf.mxu0
      %v1300 = vpop.f32.mrf.mxu0
      %v1301 = vadd.f32 0.0, %v1300
      %v1302 = vpop.f32.mrf.mxu0
      %1303 = vmatprep.mubr.bf16.mxu0 0
      %1304 = vmatmul.mubr.bf16.gmra.mxu0 %v1196
      %v1305 = vpop.f32.mrf.mxu0
      %v1306 = vadd.f32 0.0, %v1305
      %v1307 = vpop.f32.mrf.mxu0
      %v1308 = vpop.f32.mrf.mxu0
      %v1309 = vadd.f32 0.0, %v1308
      %v1310 = vpop.f32.mrf.mxu0
      %1311 = vmatprep.mubr.bf16.mxu0 0
      %1312 = vmatmul.mubr.bf16.gmra.mxu0 %v1199
      %v1313 = vpop.f32.mrf.mxu0
      %v1314 = vadd.f32 0.0, %v1313
      %v1315 = vpop.f32.mrf.mxu0
      %v1316 = vpop.f32.mrf.mxu0
      %v1317 = vadd.f32 0.0, %v1316
      %v1318 = vpop.f32.mrf.mxu0
      %1319 = vmatprep.mubr.bf16.mxu0 0
      %1320 = vmatmul.mubr.bf16.gmra.mxu0 %v1202
      %v1321 = vpop.f32.mrf.mxu0
      %v1322 = vadd.f32 0.0, %v1321
      %v1323 = vpop.f32.mrf.mxu0
      %v1324 = vpop.f32.mrf.mxu0
      %v1325 = vadd.f32 0.0, %v1324
      %v1326 = vpop.f32.mrf.mxu0
      %1327 = vmatprep.mubr.bf16.mxu0 0
      %1328 = vmatmul.mubr.bf16.gmra.mxu0 %v1205
      %v1329 = vpop.f32.mrf.mxu0
      %v1330 = vadd.f32 0.0, %v1329
      %v1331 = vpop.f32.mrf.mxu0
      %v1332 = vpop.f32.mrf.mxu0
      %v1333 = vadd.f32 0.0, %v1332
      %v1334 = vpop.f32.mrf.mxu0
      %1335 = vmatprep.mubr.bf16.mxu0 0
      %1336 = vmatmul.mubr.bf16.gmra.mxu0 %v1208
      %v1337 = vpop.f32.mrf.mxu0
      %v1338 = vadd.f32 0.0, %v1337
      %v1339 = vpop.f32.mrf.mxu0
      %v1340 = vpop.f32.mrf.mxu0
      %v1341 = vadd.f32 0.0, %v1340
      %v1342 = vpop.f32.mrf.mxu0
      %1343 = vmatprep.mubr.bf16.mxu0 0
      %1344 = vmatmul.mubr.bf16.gmra.mxu0 %v1211
      %v1345 = vpop.f32.mrf.mxu0
      %v1346 = vadd.f32 0.0, %v1345
      %v1347 = vpop.f32.mrf.mxu0
      %v1348 = vpop.f32.mrf.mxu0
      %v1349 = vadd.f32 0.0, %v1348
      %v1350 = vpop.f32.mrf.mxu0
      %1351 = vmatprep.mubr.bf16.mxu0 0
      %1352 = vmatmul.mubr.bf16.gmra.mxu0 %v1214
      %v1353 = vpop.f32.mrf.mxu0
      %v1354 = vadd.f32 0.0, %v1353
      %v1355 = vpop.f32.mrf.mxu0
      %v1356 = vpop.f32.mrf.mxu0
      %v1357 = vadd.f32 0.0, %v1356
      %v1358 = vpop.f32.mrf.mxu0
      %1359 = vmatprep.mubr.bf16.mxu0 0
      %1360 = vmatmul.mubr.bf16.gmra.mxu0 %v1217
      %v1361 = vpop.f32.mrf.mxu0
      %v1362 = vadd.f32 0.0, %v1361
      %v1363 = vpop.f32.mrf.mxu0
      %v1364 = vpop.f32.mrf.mxu0
      %v1365 = vadd.f32 0.0, %v1364
      %v1366 = vpop.f32.mrf.mxu0
      %1367 = vmatprep.mubr.bf16.mxu0 0
      %1368 = vmatmul.mubr.bf16.gmra.mxu0 %v1220
      %v1369 = vpop.f32.mrf.mxu0
      %v1370 = vadd.f32 0.0, %v1369
      %v1371 = vpop.f32.mrf.mxu0
      %v1372 = vpop.f32.mrf.mxu0
      %v1373 = vadd.f32 0.0, %v1372
      %v1374 = vpop.f32.mrf.mxu0
      %1375 = vmatprep.mubr.bf16.mxu0 0
      %1376 = vmatmul.mubr.bf16.gmra.mxu0 %v1223
      %v1377 = vpop.f32.mrf.mxu0
      %v1378 = vadd.f32 0.0, %v1377
      %v1379 = vpop.f32.mrf.mxu0
      %v1380 = vpop.f32.mrf.mxu0
      %v1381 = vadd.f32 0.0, %v1380
      %v1382 = vpop.f32.mrf.mxu0
      %1383 = vmatprep.mubr.bf16.mxu0 0
      %1384 = vmatmul.mubr.bf16.gmra.mxu0 %v1226
      %v1385 = vpop.f32.mrf.mxu0
      %v1386 = vadd.f32 0.0, %v1385
      %v1387 = vpop.f32.mrf.mxu0
      %v1388 = vpop.f32.mrf.mxu0
      %v1389 = vadd.f32 0.0, %v1388
      %v1390 = vpop.f32.mrf.mxu0
      %1391 = vdwg.mxu0
      %v1392 = vld [vmem:[%s240] sm:$0xff]
      %v1393 = vld [vmem:[%s240 + $0x8] sm:$0xff]
      %v1394 = vld [vmem:[%s240 + $0x10] sm:$0xff]
      %v1395 = vld [vmem:[%s240 + $0x18] sm:$0xff]
      %v1396 = vld [vmem:[%s240 + $0x20] sm:$0xff]
      %v1397 = vld [vmem:[%s240 + $0x28] sm:$0xff]
      %v1398 = vld [vmem:[%s240 + $0x30] sm:$0xff]
      %v1399 = vld [vmem:[%s240 + $0x38] sm:$0xff]
      %v1400 = vld [vmem:[%s240 + $0x40] sm:$0xff]
      %v1401 = vld [vmem:[%s240 + $0x48] sm:$0xff]
      %v1402 = vld [vmem:[%s240 + $0x50] sm:$0xff]
      %v1403 = vld [vmem:[%s240 + $0x58] sm:$0xff]
      %v1404 = vld [vmem:[%s240 + $0x60] sm:$0xff]
      %v1405 = vld [vmem:[%s240 + $0x68] sm:$0xff]
      %v1406 = vld [vmem:[%s240 + $0x70] sm:$0xff]
      %v1407 = vld [vmem:[%s240 + $0x78] sm:$0xff]
      %v1408 = vld [vmem:[%s240 + $0x80] sm:$0xff]
      %v1409 = vld [vmem:[%s240 + $0x88] sm:$0xff]
      %v1410 = vld [vmem:[%s240 + $0x90] sm:$0xff]
      %v1411 = vld [vmem:[%s240 + $0x98] sm:$0xff]
      %v1412 = vld [vmem:[%s240 + $0xa0] sm:$0xff]
      %v1413 = vld [vmem:[%s240 + $0xa8] sm:$0xff]
      %v1414 = vld [vmem:[%s240 + $0xb0] sm:$0xff]
      %v1415 = vld [vmem:[%s240 + $0xb8] sm:$0xff]
      %v1416 = vld [vmem:[%s240 + $0xc0] sm:$0xff]
      %v1417 = vld [vmem:[%s240 + $0xc8] sm:$0xff]
      %v1418 = vld [vmem:[%s240 + $0xd0] sm:$0xff]
      %v1419 = vld [vmem:[%s240 + $0xd8] sm:$0xff]
      %v1420 = vld [vmem:[%s240 + $0xe0] sm:$0xff]
      %v1421 = vld [vmem:[%s240 + $0xe8] sm:$0xff]
      %v1422 = vld [vmem:[%s240 + $0xf0] sm:$0xff]
      %v1423 = vld [vmem:[%s240 + $0xf8] sm:$0xff]
      %v1424 = vadd.f32 %v1392, %v1266
      %v1425 = vadd.f32 %v1393, %v1269
      %v1426 = vadd.f32 %v1394, %v1274
      %v1427 = vadd.f32 %v1395, %v1277
      %v1428 = vadd.f32 %v1396, %v1282
      %v1429 = vadd.f32 %v1397, %v1285
      %v1430 = vadd.f32 %v1398, %v1290
      %v1431 = vadd.f32 %v1399, %v1293
      %v1432 = vadd.f32 %v1400, %v1298
      %v1433 = vadd.f32 %v1401, %v1301
      %v1434 = vadd.f32 %v1402, %v1306
      %v1435 = vadd.f32 %v1403, %v1309
      %v1436 = vadd.f32 %v1404, %v1314
      %v1437 = vadd.f32 %v1405, %v1317
      %v1438 = vadd.f32 %v1406, %v1322
      %v1439 = vadd.f32 %v1407, %v1325
      %v1440 = vadd.f32 %v1408, %v1330
      %v1441 = vadd.f32 %v1409, %v1333
      %v1442 = vadd.f32 %v1410, %v1338
      %v1443 = vadd.f32 %v1411, %v1341
      %v1444 = vadd.f32 %v1412, %v1346
      %v1445 = vadd.f32 %v1413, %v1349
      %v1446 = vadd.f32 %v1414, %v1354
      %v1447 = vadd.f32 %v1415, %v1357
      %v1448 = vadd.f32 %v1416, %v1362
      %v1449 = vadd.f32 %v1417, %v1365
      %v1450 = vadd.f32 %v1418, %v1370
      %v1451 = vadd.f32 %v1419, %v1373
      %v1452 = vadd.f32 %v1420, %v1378
      %v1453 = vadd.f32 %v1421, %v1381
      %v1454 = vadd.f32 %v1422, %v1386
      %v1455 = vadd.f32 %v1423, %v1389
      %1456 = vst [vmem:[%s240] sm:$0xff] %v1424
      %1457 = vst [vmem:[%s240 + $0x8] sm:$0xff] %v1425
      %1458 = vst [vmem:[%s240 + $0x10] sm:$0xff] %v1426
      %1459 = vst [vmem:[%s240 + $0x18] sm:$0xff] %v1427
      %1460 = vst [vmem:[%s240 + $0x20] sm:$0xff] %v1428
      %1461 = vst [vmem:[%s240 + $0x28] sm:$0xff] %v1429
      %1462 = vst [vmem:[%s240 + $0x30] sm:$0xff] %v1430
      %1463 = vst [vmem:[%s240 + $0x38] sm:$0xff] %v1431
      %1464 = vst [vmem:[%s240 + $0x40] sm:$0xff] %v1432
      %1465 = vst [vmem:[%s240 + $0x48] sm:$0xff] %v1433
      %1466 = vst [vmem:[%s240 + $0x50] sm:$0xff] %v1434
      %1467 = vst [vmem:[%s240 + $0x58] sm:$0xff] %v1435
      %1468 = vst [vmem:[%s240 + $0x60] sm:$0xff] %v1436
      %1469 = vst [vmem:[%s240 + $0x68] sm:$0xff] %v1437
      %1470 = vst [vmem:[%s240 + $0x70] sm:$0xff] %v1438
      %1471 = vst [vmem:[%s240 + $0x78] sm:$0xff] %v1439
      %1472 = vst [vmem:[%s240 + $0x80] sm:$0xff] %v1440
      %1473 = vst [vmem:[%s240 + $0x88] sm:$0xff] %v1441
      %1474 = vst [vmem:[%s240 + $0x90] sm:$0xff] %v1442
      %1475 = vst [vmem:[%s240 + $0x98] sm:$0xff] %v1443
      %1476 = vst [vmem:[%s240 + $0xa0] sm:$0xff] %v1444
      %1477 = vst [vmem:[%s240 + $0xa8] sm:$0xff] %v1445
      %1478 = vst [vmem:[%s240 + $0xb0] sm:$0xff] %v1446
      %1479 = vst [vmem:[%s240 + $0xb8] sm:$0xff] %v1447
      %1480 = vst [vmem:[%s240 + $0xc0] sm:$0xff] %v1448
      %1481 = vst [vmem:[%s240 + $0xc8] sm:$0xff] %v1449
      %1482 = vst [vmem:[%s240 + $0xd0] sm:$0xff] %v1450
      %1483 = vst [vmem:[%s240 + $0xd8] sm:$0xff] %v1451
      %1484 = vst [vmem:[%s240 + $0xe0] sm:$0xff] %v1452
      %1485 = vst [vmem:[%s240 + $0xe8] sm:$0xff] %v1453
      %1486 = vst [vmem:[%s240 + $0xf0] sm:$0xff] %v1454
      %1487 = vst [vmem:[%s240 + $0xf8] sm:$0xff] %v1455
      %v1488 = vld [vmem:[%s240] sm:$0xff]
      %v1489 = vld [vmem:[%s240 + $0x8] sm:$0xff]
      %v1490 = vld [vmem:[%s240 + $0x10] sm:$0xff]
      %v1491 = vld [vmem:[%s240 + $0x18] sm:$0xff]
      %v1492 = vld [vmem:[%s240 + $0x20] sm:$0xff]
      %v1493 = vld [vmem:[%s240 + $0x28] sm:$0xff]
      %v1494 = vld [vmem:[%s240 + $0x30] sm:$0xff]
      %v1495 = vld [vmem:[%s240 + $0x38] sm:$0xff]
      %v1496 = vld [vmem:[%s240 + $0x40] sm:$0xff]
      %v1497 = vld [vmem:[%s240 + $0x48] sm:$0xff]
      %v1498 = vld [vmem:[%s240 + $0x50] sm:$0xff]
      %v1499 = vld [vmem:[%s240 + $0x58] sm:$0xff]
      %v1500 = vld [vmem:[%s240 + $0x60] sm:$0xff]
      %v1501 = vld [vmem:[%s240 + $0x68] sm:$0xff]
      %v1502 = vld [vmem:[%s240 + $0x70] sm:$0xff]
      %v1503 = vld [vmem:[%s240 + $0x78] sm:$0xff]
      %v1504 = vld [vmem:[%s240 + $0x80] sm:$0xff]
      %v1505 = vld [vmem:[%s240 + $0x88] sm:$0xff]
      %v1506 = vld [vmem:[%s240 + $0x90] sm:$0xff]
      %v1507 = vld [vmem:[%s240 + $0x98] sm:$0xff]
      %v1508 = vld [vmem:[%s240 + $0xa0] sm:$0xff]
      %v1509 = vld [vmem:[%s240 + $0xa8] sm:$0xff]
      %v1510 = vld [vmem:[%s240 + $0xb0] sm:$0xff]
      %v1511 = vld [vmem:[%s240 + $0xb8] sm:$0xff]
      %v1512 = vld [vmem:[%s240 + $0xc0] sm:$0xff]
      %v1513 = vld [vmem:[%s240 + $0xc8] sm:$0xff]
      %v1514 = vld [vmem:[%s240 + $0xd0] sm:$0xff]
      %v1515 = vld [vmem:[%s240 + $0xd8] sm:$0xff]
      %v1516 = vld [vmem:[%s240 + $0xe0] sm:$0xff]
      %v1517 = vld [vmem:[%s240 + $0xe8] sm:$0xff]
      %v1518 = vld [vmem:[%s240 + $0xf0] sm:$0xff]
      %v1519 = vld [vmem:[%s240 + $0xf8] sm:$0xff]
      %v1520 = vadd.f32 %v1488, %v1489
      %v1521 = vadd.f32 %v1520, %v1490
      %v1522 = vadd.f32 %v1521, %v1491
      %v1523 = vadd.f32 %v1522, %v1492
      %v1524 = vadd.f32 %v1523, %v1493
      %v1525 = vadd.f32 %v1524, %v1494
      %v1526 = vadd.f32 %v1525, %v1495
      %v1527 = vadd.f32 %v1526, %v1496
      %v1528 = vadd.f32 %v1527, %v1497
      %v1529 = vadd.f32 %v1528, %v1498
      %v1530 = vadd.f32 %v1529, %v1499
      %v1531 = vadd.f32 %v1530, %v1500
      %v1532 = vadd.f32 %v1531, %v1501
      %v1533 = vadd.f32 %v1532, %v1502
      %v1534 = vadd.f32 %v1533, %v1503
      %v1535 = vadd.f32 %v1534, %v1504
      %v1536 = vadd.f32 %v1535, %v1505
      %v1537 = vadd.f32 %v1536, %v1506
      %v1538 = vadd.f32 %v1537, %v1507
      %v1539 = vadd.f32 %v1538, %v1508
      %v1540 = vadd.f32 %v1539, %v1509
      %v1541 = vadd.f32 %v1540, %v1510
      %v1542 = vadd.f32 %v1541, %v1511
      %v1543 = vadd.f32 %v1542, %v1512
      %v1544 = vadd.f32 %v1543, %v1513
      %v1545 = vadd.f32 %v1544, %v1514
      %v1546 = vadd.f32 %v1545, %v1515
      %v1547 = vadd.f32 %v1546, %v1516
      %v1548 = vadd.f32 %v1547, %v1517
      %v1549 = vadd.f32 %v1548, %v1518
      %v1550 = vadd.f32 %v1549, %v1519
      %v1551 = vrot.slane %v1550, 4
      %v1552 = vadd.f32 %v1550, %v1551
      %v1553 = vrot.slane %v1552, 2
      %v1554 = vadd.f32 %v1552, %v1553
      %v1555 = vrot.slane %v1554, 1
      %v1556 = vadd.f32 %v1554, %v1555
      %1557 = vst [vmem:[%s247] sm:$0x1] %v1556
      %v1558 = vmul.f32 %v1488, %v1488
      %v1559 = vmul.f32 %v1489, %v1489
      %v1560 = vmul.f32 %v1490, %v1490
      %v1561 = vmul.f32 %v1491, %v1491
      %v1562 = vmul.f32 %v1492, %v1492
      %v1563 = vmul.f32 %v1493, %v1493
      %v1564 = vmul.f32 %v1494, %v1494
      %v1565 = vmul.f32 %v1495, %v1495
      %v1566 = vmul.f32 %v1496, %v1496
      %v1567 = vmul.f32 %v1497, %v1497
      %v1568 = vmul.f32 %v1498, %v1498
      %v1569 = vmul.f32 %v1499, %v1499
      %v1570 = vmul.f32 %v1500, %v1500
      %v1571 = vmul.f32 %v1501, %v1501
      %v1572 = vmul.f32 %v1502, %v1502
      %v1573 = vmul.f32 %v1503, %v1503
      %v1574 = vmul.f32 %v1504, %v1504
      %v1575 = vmul.f32 %v1505, %v1505
      %v1576 = vmul.f32 %v1506, %v1506
      %v1577 = vmul.f32 %v1507, %v1507
      %v1578 = vmul.f32 %v1508, %v1508
      %v1579 = vmul.f32 %v1509, %v1509
      %v1580 = vmul.f32 %v1510, %v1510
      %v1581 = vmul.f32 %v1511, %v1511
      %v1582 = vmul.f32 %v1512, %v1512
      %v1583 = vmul.f32 %v1513, %v1513
      %v1584 = vmul.f32 %v1514, %v1514
      %v1585 = vmul.f32 %v1515, %v1515
      %v1586 = vmul.f32 %v1516, %v1516
      %v1587 = vmul.f32 %v1517, %v1517
      %v1588 = vmul.f32 %v1518, %v1518
      %v1589 = vmul.f32 %v1519, %v1519
      %v1590 = vadd.f32 %v1558, %v1559
      %v1591 = vadd.f32 %v1590, %v1560
      %v1592 = vadd.f32 %v1591, %v1561
      %v1593 = vadd.f32 %v1592, %v1562
      %v1594 = vadd.f32 %v1593, %v1563
      %v1595 = vadd.f32 %v1594, %v1564
      %v1596 = vadd.f32 %v1595, %v1565
      %v1597 = vadd.f32 %v1596, %v1566
      %v1598 = vadd.f32 %v1597, %v1567
      %v1599 = vadd.f32 %v1598, %v1568
      %v1600 = vadd.f32 %v1599, %v1569
      %v1601 = vadd.f32 %v1600, %v1570
      %v1602 = vadd.f32 %v1601, %v1571
      %v1603 = vadd.f32 %v1602, %v1572
      %v1604 = vadd.f32 %v1603, %v1573
      %v1605 = vadd.f32 %v1604, %v1574
      %v1606 = vadd.f32 %v1605, %v1575
      %v1607 = vadd.f32 %v1606, %v1576
      %v1608 = vadd.f32 %v1607, %v1577
      %v1609 = vadd.f32 %v1608, %v1578
      %v1610 = vadd.f32 %v1609, %v1579
      %v1611 = vadd.f32 %v1610, %v1580
      %v1612 = vadd.f32 %v1611, %v1581
      %v1613 = vadd.f32 %v1612, %v1582
      %v1614 = vadd.f32 %v1613, %v1583
      %v1615 = vadd.f32 %v1614, %v1584
      %v1616 = vadd.f32 %v1615, %v1585
      %v1617 = vadd.f32 %v1616, %v1586
      %v1618 = vadd.f32 %v1617, %v1587
      %v1619 = vadd.f32 %v1618, %v1588
      %v1620 = vadd.f32 %v1619, %v1589
      %v1621 = vrot.slane %v1620, 4
      %v1622 = vadd.f32 %v1620, %v1621
      %v1623 = vrot.slane %v1622, 2
      %v1624 = vadd.f32 %v1622, %v1623
      %v1625 = vrot.slane %v1624, 1
      %v1626 = vadd.f32 %v1624, %v1625
      %1627 = vst [vmem:[%s253] sm:$0x1] %v1626
      %s1628 = smul.u32 32, %s21
      %p1629 = scmp.lt.s32.totalorder %s20, 1
      %s1630 = scalar_select %p1629, %s20, 1
      %p1631 = scmp.lt.s32.totalorder %s1628, 31
      %s1632 = scalar_select %p1631, %s1628, 31
      %s1633 = smul.addr %s1630, 32
      %s1634 = sadd.s32 %s1632, %s1633
      %s1635 = smul.addr %s1634, 8
      %s1636 = scalar_lea.vmem %s2, %s1635
      %p1637 = scmp.lt.s32.totalorder %s20, 1
      %s1638 = scalar_select %p1637, %s20, 1
      %p1639 = scmp.lt.s32.totalorder %s21, 0
      %s1640 = scalar_select %p1639, %s21, 0
      %s1641 = sadd.s32 %s1640, %s1638
      %s1642 = scalar_lea.vmem %s3, %s1641
      %p1643 = scmp.lt.s32.totalorder %s20, 1
      %s1644 = scalar_select %p1643, %s20, 1
      %p1645 = scmp.lt.s32.totalorder %s21, 0
      %s1646 = scalar_select %p1645, %s21, 0
      %s1647 = sadd.s32 %s1646, %s1644
      %s1648 = scalar_lea.vmem %s4, %s1647
      // Predicated region
      $region29: #{conv_bn.2} parent=27 // pred_check
        %p1649 = pneg %p95
      $region30: #{conv_bn.2} parent=27 // pred_check_branch
        %1651 = sbr.rel (%p1649) target = $region32
      $region31: #{conv_bn.2} parent=27 // pred_region
        %s1652 = smul.u32 32, %s21
      $region32: #{conv_bn.2} parent=27 // pred_fallthru
        _
      // Predicated region
      $region33: #{conv_bn.2} parent=27 // pred_check
        %p1653 = pneg %p123
      $region34: #{conv_bn.2} parent=27 // pred_check_branch
        %1655 = sbr.rel (%p1653) target = $region36
      $region35: #{conv_bn.2} parent=27 // pred_region
        _
      $region36: #{conv_bn.2} parent=27 // pred_fallthru
        _
      // Predicated region
      $region37: #{conv_bn.2} parent=27 // pred_check
        %p1656 = pneg %p151
      $region38: #{conv_bn.2} parent=27 // pred_check_branch
        %1658 = sbr.rel (%p1656) target = $region40
      $region39: #{conv_bn.2} parent=27 // pred_region
        _
      $region40: #{conv_bn.2} parent=27 // pred_fallthru
        _
    $region28: #{conv_bn.2} parent=5 // pred_fallthru
      _
    %p1659 = scmp.le.s32.totalorder 2, %s11
    // Predicated region
    $region41: #{conv_bn.2} parent=5 // pred_check
      %p1660 = pneg %p1659
    $region42: #{conv_bn.2} parent=5 // pred_check_branch
      %1662 = sbr.rel (%p1660) target = $region44
    $region43: #{conv_bn.2} parent=5 // pred_region
      %s1663 = ssub.s32 %s11, 2
      // Predicated region
      $region45: #{conv_bn.2} parent=43 // pred_check
        %p1664 = pneg %p101
      $region46: #{conv_bn.2} parent=43 // pred_check_branch
        %1666 = sbr.rel (%p1664) target = $region48
      $region47: #{conv_bn.2} parent=43 // pred_region
        %s1667 = smul.u32 32, %s23
        %p1668 = scmp.lt.s32.totalorder %s22, 1
        %s1669 = scalar_select %p1668, %s22, 1
        %p1670 = scmp.lt.s32.totalorder %s1667, 31
        %s1671 = scalar_select %p1670, %s1667, 31
        %s1672 = smul.addr %s1669, 32
        %s1673 = sadd.s32 %s1671, %s1672
        %s1674 = smul.addr %s1673, 8
        %s1675 = scalar_lea.vmem %s2, %s1674
      $region48: #{conv_bn.2} parent=43 // pred_fallthru
        _
      // Predicated region
      $region49: #{conv_bn.2} parent=43 // pred_check
        %p1676 = pneg %p129
      $region50: #{conv_bn.2} parent=43 // pred_check_branch
        %1678 = sbr.rel (%p1676) target = $region52
      $region51: #{conv_bn.2} parent=43 // pred_region
        %p1679 = scmp.lt.s32.totalorder %s22, 1
        %s1680 = scalar_select %p1679, %s22, 1
        %p1681 = scmp.lt.s32.totalorder %s23, 0
        %s1682 = scalar_select %p1681, %s23, 0
        %s1683 = sadd.s32 %s1682, %s1680
        %s1684 = scalar_lea.vmem %s3, %s1683
      $region52: #{conv_bn.2} parent=43 // pred_fallthru
        _
      // Predicated region
      $region53: #{conv_bn.2} parent=43 // pred_check
        %p1685 = pneg %p157
      $region54: #{conv_bn.2} parent=43 // pred_check_branch
        %1687 = sbr.rel (%p1685) target = $region56
      $region55: #{conv_bn.2} parent=43 // pred_region
        %p1688 = scmp.lt.s32.totalorder %s22, 1
        %s1689 = scalar_select %p1688, %s22, 1
        %p1690 = scmp.lt.s32.totalorder %s23, 0
        %s1691 = scalar_select %p1690, %s23, 0
        %s1692 = sadd.s32 %s1691, %s1689
        %s1693 = scalar_lea.vmem %s4, %s1692
      $region56: #{conv_bn.2} parent=43 // pred_fallthru
        _
    $region44: #{conv_bn.2} parent=5 // pred_fallthru
      _
  $region6: #{conv_bn.2} parent=0 // loop_footer
    %s15 = sadd.s32 1, %s11
  $region7: #{conv_bn.2} parent=0 // loop_footer_branch
    %10 = sbr.rel target = $region3
  $region8: #{conv_bn.2} parent=0 // loop_exit
    _

</llo_original>
